<compile_context>
chip_gen: v7x
topology: tpu7x:2x2x1
jax: 0.10.0
libtpu: 0.0.40
codegen_flags: <defaults>
</compile_context>

<pallas_src>
import math

import jax
import jax.numpy as jnp
from jax.experimental import pallas as pl
from jax.experimental.pallas import tpu as pltpu

# ----------------- scaled-down "BERT" config -----------------
VOCAB = 100
TYPE_VOCAB = 2
MAX_POS = 16
HIDDEN = 32          # stands in for 768
N_HEADS = 4
HEAD_DIM = HIDDEN // N_HEADS
FFN = 64             # stands in for 3072
N_LAYERS = 2         # stands in for 12
HEAD_H1 = 64         # stands in for 1024 (out1: 768 -> 1024)
N_CLASSES = 3
OUT_PAD = 128        # lane-dense padded logits width
OUT_ROWS = 8         # sublane-dense padded logits rows per batch block
LN_EPS = 1e-12
BN_EPS = 1e-5
B_BLOCK = 1          # sequences per grid step (batch axis is megacore-parallel)


def _layer_norm(x, gamma, beta):
    mu = jnp.mean(x, axis=-1, keepdims=True)
    var = jnp.mean((x - mu) ** 2, axis=-1, keepdims=True)
    return (x - mu) * jax.lax.rsqrt(var + LN_EPS) * gamma + beta


# ----------------- fused Pallas kernel -----------------
def fused_bert_kernel(x_ref, bias_ref,
                      wqkv_ref, wo_ref, w1_ref, w2_ref, psmall_ref,
                      hw1_ref, hw2_ref, hsmall_ref,
                      out_ref,
                      xs_ref, ctx_ref):
    """One (batch_block, layer) grid step; head gated on the last layer.

    x_ref:      (Bb, S, H)   f32 embedded input block
    bias_ref:   (NH, Bb, 1, S) f32 additive attention-mask bias (head-major)
    wqkv_ref:   (1, H, 3H)   bf16  this layer's fused QKV weight (Q pre-scaled)
    wo_ref:     (1, H, H)    bf16
    w1_ref:     (1, H, FFN)  bf16
    w2_ref:     (1, FFN, H)  bf16
    psmall_ref: (1, 8, 3H)   f32 packed small params:
                row0 bqkv | row1 bo | row2 ln1_g | row3 ln1_b |
                row4 b1   | row5 b2 | row6 ln2_g | row7 ln2_b
    hw1_ref:    (H, HEAD_H1)     bf16  out1 weight with bn2 folded in
    hw2_ref:    (HEAD_H1, OUT_PAD) bf16 out2 weight, zero-padded past N_CLASSES
    hsmall_ref: (8, OUT_PAD) f32: row0 bn1_scale | row1 bn1_shift |
                row2 out1 bias (bn2 folded) | row3 out2 bias (padded)
    out_ref:    (Bb, 8, OUT_PAD) f32 padded logits (row-replicated)
    xs_ref:     (Bb*S, H) f32 VMEM scratch: activations carried across layers
    ctx_ref:    (Bb*S, H) f32 VMEM scratch: per-layer attention context
    """
    l = pl.program_id(1)
    Bb, S, H = x_ref.shape
    BS = Bb * S
    NHB = N_HEADS * Bb
    bf16 = jnp.bfloat16

    @pl.when(l == 0)
    def _():
        xs_ref[...] = x_ref[...].reshape(BS, H)

    x = xs_ref[...]                                     # (BS, H) f32

    sp = psmall_ref[0]                                  # (8, 3H)
    bqkv = sp[0:1, :]
    bo, ln1g, ln1b = sp[1:2, :H], sp[2:3, :H], sp[3:4, :H]
    b1 = sp[4:5, :FFN]
    b2, ln2g, ln2b = sp[5:6, :H], sp[6:7, :H], sp[7:8, :H]

    # ---- fused QKV projection: one MXU dot, bf16 operands, f32 acc ----
    # (1/sqrt(head_dim) already folded into the Q columns / Q bias offline)
    qkv = jnp.dot(x.astype(bf16), wqkv_ref[0],
                  preferred_element_type=jnp.float32) + bqkv        # (BS, 3H)

    # ---- multi-head attention: heads folded into the einsum batch dim ----
    def split_heads(off):
        # lane slices stacked on a new leading (batch) axis: (NH, BS, D)
        hs = jnp.stack([qkv[:, off + h * HEAD_DIM: off + (h + 1) * HEAD_DIM]
                        for h in range(N_HEADS)], axis=0)
        return hs.reshape(NHB, S, HEAD_DIM)             # (h, b) batch ordering

    q = split_heads(0)
    k = split_heads(H)
    v = split_heads(2 * H)

    bias_full = jnp.broadcast_to(bias_ref[...].reshape(NHB, 1, S), (NHB, S, S))

    scores = jnp.einsum('bqd,bkd->bqk', q.astype(bf16), k.astype(bf16),
                        preferred_element_type=jnp.float32) + bias_full
    scores = scores - jnp.max(scores, axis=-1, keepdims=True)
    p = jnp.exp(scores)
    p = p * pl.reciprocal(jnp.sum(p, axis=-1, keepdims=True), approx=True)
    ctx = jnp.einsum('bqk,bkd->bqd', p.astype(bf16), v.astype(bf16),
                     preferred_element_type=jnp.float32)            # (NHB, S, D)

    # scatter each head's context into lane-offset slices of the VMEM scratch
    ctx_bsd = ctx.reshape(N_HEADS, BS, HEAD_DIM)        # (h, (b,s), d)
    for h in range(N_HEADS):
        ctx_ref[:, h * HEAD_DIM:(h + 1) * HEAD_DIM] = ctx_bsd[h]

    attn = jnp.dot(ctx_ref[...].astype(bf16), wo_ref[0],
                   preferred_element_type=jnp.float32) + bo
    h1 = _layer_norm(x + attn, ln1g, ln1b)

    # ---- feed-forward ----
    ff = jnp.dot(h1.astype(bf16), w1_ref[0],
                 preferred_element_type=jnp.float32) + b1
    ff = jax.nn.gelu(ff, approximate=True)
    ff = jnp.dot(ff.astype(bf16), w2_ref[0],
                 preferred_element_type=jnp.float32) + b2
    x_new = _layer_norm(h1 + ff, ln2g, ln2b)
    xs_ref[...] = x_new                                 # carry to next layer

    # ---- classification head on the [CLS] rows, last layer only ----
    @pl.when(l == pl.num_programs(1) - 1)
    def _():
        if Bb == 1:
            cls = xs_ref[0:1, :]                        # CLS row of the block
        else:
            cls = xs_ref[pl.ds(0, Bb, stride=S), :]     # rows {b*S}
        hs = hsmall_ref[...]                            # (8, OUT_PAD)

        y = cls * hs[0:1, :H] + hs[1:2, :H]             # bat1 (folded affine)
        y = jnp.maximum(y, 0.0)                         # rel1
        # Dropout(0.4): identity at inference.
        y = jnp.dot(y.astype(bf16), hw1_ref[...],
                    preferred_element_type=jnp.float32) + hs[2:3, :HEAD_H1]
        # bat2 folded into hw1/bias above.
        y = jnp.maximum(y, 0.0)                         # rel2
        y = jnp.dot(y.astype(bf16), hw2_ref[...],
                    preferred_element_type=jnp.float32) + hs[3:4, :]
        y = jnp.maximum(y, 0.0)                         # rel3 (pad lanes stay 0)
        # replicate across 8 sublanes -> unmasked (8, 128) store
        out_ref[...] = jnp.broadcast_to(y[:, None, :], (Bb, OUT_ROWS, OUT_PAD))


# ----------------- wrappers -----------------
def embed(input_ids, token_type_ids, emb):
    # Embedding gather + LayerNorm: glue in plain JAX.
    S = input_ids.shape[1]
    x = emb["word"][input_ids] + emb["pos"][:S][None, :, :] + emb["typ"][token_type_ids]
    mu = x.mean(-1, keepdims=True)
    var = ((x - mu) ** 2).mean(-1, keepdims=True)
    return (x - mu) / jnp.sqrt(var + LN_EPS) * emb["ln_g"] + emb["ln_b"]


def bert_classification_forward(input_ids, token_type_ids, attention_mask, params):
    emb, layers, head = params
    x = embed(input_ids, token_type_ids, emb)                       # (B, S, H)
    B, S, _ = x.shape
    attn_bias = (attention_mask.astype(jnp.float32) - 1.0) * 1e9    # (B, S)
    bias4 = jnp.broadcast_to(attn_bias[None, :, None, :], (N_HEADS, B, 1, S))

    Bb = B_BLOCK
    grid = (B // Bb, N_LAYERS)

    in_specs = [
        pl.BlockSpec((Bb, S, HIDDEN), lambda bi, l: (bi, 0, 0)),            # x
        pl.BlockSpec((N_HEADS, Bb, 1, S), lambda bi, l: (0, bi, 0, 0)),     # bias
        pl.BlockSpec((1, HIDDEN, 3 * HIDDEN), lambda bi, l: (l, 0, 0)),     # wqkv
        pl.BlockSpec((1, HIDDEN, HIDDEN), lambda bi, l: (l, 0, 0)),         # wo
        pl.BlockSpec((1, HIDDEN, FFN), lambda bi, l: (l, 0, 0)),            # w1
        pl.BlockSpec((1, FFN, HIDDEN), lambda bi, l: (l, 0, 0)),            # w2
        pl.BlockSpec((1, 8, 3 * HIDDEN), lambda bi, l: (l, 0, 0)),          # psmall
        pl.BlockSpec((HIDDEN, HEAD_H1), lambda bi, l: (0, 0)),              # hw1
        pl.BlockSpec((HEAD_H1, OUT_PAD), lambda bi, l: (0, 0)),             # hw2
        pl.BlockSpec((8, OUT_PAD), lambda bi, l: (0, 0)),                   # hsmall
    ]
    out_spec = pl.BlockSpec((Bb, OUT_ROWS, OUT_PAD), lambda bi, l: (bi, 0, 0))

    # advisory cost estimate (lets XLA schedule surrounding ops sensibly)
    BS = B * S
    flops_layer = (2 * BS * HIDDEN * 3 * HIDDEN
                   + 2 * 2 * (B * N_HEADS) * S * S * HEAD_DIM
                   + 2 * BS * HIDDEN * HIDDEN
                   + 2 * BS * HIDDEN * FFN * 2)
    flops = N_LAYERS * flops_layer + 2 * B * HIDDEN * HEAD_H1 + 2 * B * HEAD_H1 * OUT_PAD
    transcendentals = N_LAYERS * (B * N_HEADS * S * S + BS * FFN)
    bytes_accessed = (x.size * 4 + bias4.size * 4
                      + sum(int(layers[k].size) * 2 for k in ("wqkv", "wo", "w1", "w2"))
                      + int(layers["psmall"].size) * 4
                      + int(head["w1"].size) * 2 + int(head["w2"].size) * 2
                      + int(head["small"].size) * 4
                      + B * OUT_ROWS * OUT_PAD * 4)
    cost = pl.CostEstimate(flops=int(flops),
                           transcendentals=int(transcendentals),
                           bytes_accessed=int(bytes_accessed))

    logits_pad = pl.pallas_call(
        fused_bert_kernel,
        out_shape=jax.ShapeDtypeStruct((B, OUT_ROWS, OUT_PAD), jnp.float32),
        grid_spec=pltpu.PrefetchScalarGridSpec(
            num_scalar_prefetch=0,
            grid=grid,
            in_specs=in_specs,
            out_specs=out_spec,
            scratch_shapes=[pltpu.VMEM((Bb * S, HIDDEN), jnp.float32),   # activations
                            pltpu.VMEM((Bb * S, HIDDEN), jnp.float32)],  # attn ctx
        ),
        compiler_params=pltpu.CompilerParams(
            dimension_semantics=("parallel", "arbitrary"),
            vmem_limit_bytes=64 * 1024 * 1024,
        ),
        cost_estimate=cost,
    )(x, bias4,
      layers["wqkv"], layers["wo"], layers["w1"], layers["w2"], layers["psmall"],
      head["w1"], head["w2"], head["small"])

    # pooler=False, outputlayer=-1: head ran on the last hidden state's CLS.
    return logits_pad[:, 0, :N_CLASSES]


# ----------------- deterministic parameter init -----------------
def init_params(seed=0):
    key = jax.random.PRNGKey(seed)
    keys = list(jax.random.split(key, 64))
    it = iter(keys)

    def nrm(shape, scale=0.02):
        return (scale * jax.random.normal(next(it), shape)).astype(jnp.float32)

    emb = dict(
        word=nrm((VOCAB, HIDDEN)),
        pos=nrm((MAX_POS, HIDDEN)),
        typ=nrm((TYPE_VOCAB, HIDDEN)),
        ln_g=jnp.ones((HIDDEN,), jnp.float32),
        ln_b=jnp.zeros((HIDDEN,), jnp.float32),
    )

    qk_scale = 1.0 / math.sqrt(HEAD_DIM)

    wqkv_l, wo_l, w1_l, w2_l, ps_l = [], [], [], [], []
    for _ in range(N_LAYERS):
        wq, wk, wv = nrm((HIDDEN, HIDDEN)), nrm((HIDDEN, HIDDEN)), nrm((HIDDEN, HIDDEN))
        bq, bk, bv = nrm((HIDDEN,)), nrm((HIDDEN,)), nrm((HIDDEN,))
        wo, bo = nrm((HIDDEN, HIDDEN)), nrm((HIDDEN,))
        w1, b1 = nrm((HIDDEN, FFN)), nrm((FFN,))
        w2, b2 = nrm((FFN, HIDDEN)), nrm((HIDDEN,))

        # fold 1/sqrt(head_dim) into the Q projection (exact at inference)
        wqkv_l.append(jnp.concatenate([wq * qk_scale, wk, wv], axis=1))   # (H, 3H)
        wo_l.append(wo)
        w1_l.append(w1)
        w2_l.append(w2)

        sp = jnp.zeros((8, 3 * HIDDEN), jnp.float32)
        sp = sp.at[0, :].set(jnp.concatenate([bq * qk_scale, bk, bv]))
        sp = sp.at[1, :HIDDEN].set(bo)
        sp = sp.at[2, :HIDDEN].set(1.0)          # ln1 gamma (beta row 3 stays 0)
        sp = sp.at[4, :FFN].set(b1)
        sp = sp.at[5, :HIDDEN].set(b2)
        sp = sp.at[6, :HIDDEN].set(1.0)          # ln2 gamma (beta row 7 stays 0)
        ps_l.append(sp)

    layers = dict(
        wqkv=jnp.stack(wqkv_l).astype(jnp.bfloat16),
        wo=jnp.stack(wo_l).astype(jnp.bfloat16),
        w1=jnp.stack(w1_l).astype(jnp.bfloat16),
        w2=jnp.stack(w2_l).astype(jnp.bfloat16),
        psmall=jnp.stack(ps_l),
    )

    # classification head (BatchNorms folded offline; running stats, inference)
    hw1, hb1 = nrm((HIDDEN, HEAD_H1)), nrm((HEAD_H1,))
    hw2, hb2 = nrm((HEAD_H1, N_CLASSES)), nrm((N_CLASSES,))
    bn1_gamma, bn1_beta = jnp.ones((HIDDEN,)), jnp.zeros((HIDDEN,))
    bn2_gamma, bn2_beta = jnp.ones((HEAD_H1,)), jnp.zeros((HEAD_H1,))
    bn1_mean = 0.1 * jax.random.normal(next(it), (HIDDEN,))
    bn1_var = 1.0 + 0.05 * jnp.abs(jax.random.normal(next(it), (HIDDEN,)))
    bn2_mean = 0.1 * jax.random.normal(next(it), (HEAD_H1,))
    bn2_var = 1.0 + 0.05 * jnp.abs(jax.random.normal(next(it), (HEAD_H1,)))

    # bn1 -> per-channel affine (applied before relu/out1)
    bn1_scale = bn1_gamma / jnp.sqrt(bn1_var + BN_EPS)
    bn1_shift = bn1_beta - bn1_mean * bn1_scale
    # bn2 folded into out1: bn2(W x + b) = (W * s2) x + (b * s2 + shift2)
    bn2_scale = bn2_gamma / jnp.sqrt(bn2_var + BN_EPS)
    bn2_shift = bn2_beta - bn2_mean * bn2_scale
    hw1_folded = hw1 * bn2_scale[None, :]
    hb1_folded = hb1 * bn2_scale + bn2_shift

    hw2_pad = jnp.zeros((HEAD_H1, OUT_PAD), jnp.float32).at[:, :N_CLASSES].set(hw2)
    hs = jnp.zeros((8, OUT_PAD), jnp.float32)
    hs = hs.at[0, :HIDDEN].set(bn1_scale)
    hs = hs.at[1, :HIDDEN].set(bn1_shift)
    hs = hs.at[2, :HEAD_H1].set(hb1_folded)
    hs = hs.at[3, :N_CLASSES].set(hb2)

    head = dict(w1=hw1_folded.astype(jnp.bfloat16),
                w2=hw2_pad.astype(jnp.bfloat16),
                small=hs)
    return emb, layers, head


if __name__ == "__main__":
    B, S = 2, 8
    params = init_params(seed=0)

    key = jax.random.PRNGKey(0)
    k_ids, _ = jax.random.split(key)
    input_ids = jax.random.randint(k_ids, (B, S), 0, VOCAB, dtype=jnp.int32)
    token_type_ids = jnp.zeros((B, S), dtype=jnp.int32)
    attention_mask = jnp.ones((B, S), dtype=jnp.int32)
    # exercise the attention mask: pad the tail of the second sequence
    attention_mask = attention_mask.at[1, 6:].set(0)

    fwd = jax.jit(bert_classification_forward)
    out = fwd(input_ids, token_type_ids, attention_mask, params)
    out = jax.block_until_ready(out)
    assert out.shape == (B, N_CLASSES) and out.dtype == jnp.float32
    print("KERNEL_OK")
</pallas_src>

<mosaic_0001>
module attributes {stable_mosaic.version = 11 : i64} {
  func.func @fused_bert_kernel(%arg0: i32, %arg1: i32, %arg2: memref<1x8x32xf32, #tpu.memory_space<vmem>>, %arg3: memref<4x1x1x8xf32, #tpu.memory_space<vmem>>, %arg4: memref<1x32x96xbf16, #tpu.memory_space<vmem>>, %arg5: memref<1x32x32xbf16, #tpu.memory_space<vmem>>, %arg6: memref<1x32x64xbf16, #tpu.memory_space<vmem>>, %arg7: memref<1x64x32xbf16, #tpu.memory_space<vmem>>, %arg8: memref<1x8x96xf32, #tpu.memory_space<vmem>>, %arg9: memref<32x64xbf16, #tpu.memory_space<vmem>>, %arg10: memref<64x128xbf16, #tpu.memory_space<vmem>>, %arg11: memref<8x128xf32, #tpu.memory_space<vmem>>, %arg12: memref<1x8x128xf32, #tpu.memory_space<vmem>>, %arg13: memref<8x32xf32, #tpu.memory_space<vmem>>, %arg14: memref<8x32xf32, #tpu.memory_space<vmem>>) attributes {dimension_semantics = [#tpu.dimension_semantics<parallel>, #tpu.dimension_semantics<arbitrary>], iteration_bounds = array<i64: 2, 2>, scalar_prefetch = 0 : i64, scratch_operands = 2 : i64, tpu.core_type = #tpu.core_type<tc>, window_params = [{transform_indices = @transform_0, window_bounds = array<i64: 1, 8, 32>}, {transform_indices = @transform_1, window_bounds = array<i64: 4, 1, 1, 8>}, {transform_indices = @transform_2, window_bounds = array<i64: 1, 32, 96>}, {transform_indices = @transform_3, window_bounds = array<i64: 1, 32, 32>}, {transform_indices = @transform_4, window_bounds = array<i64: 1, 32, 64>}, {transform_indices = @transform_5, window_bounds = array<i64: 1, 64, 32>}, {transform_indices = @transform_6, window_bounds = array<i64: 1, 8, 96>}, {pipeline_mode = #tpu.pipeline_mode<synchronous>, transform_indices = @transform_7, window_bounds = array<i64: 32, 64>}, {pipeline_mode = #tpu.pipeline_mode<synchronous>, transform_indices = @transform_8, window_bounds = array<i64: 64, 128>}, {pipeline_mode = #tpu.pipeline_mode<synchronous>, transform_indices = @transform_9, window_bounds = array<i64: 8, 128>}, {transform_indices = @transform_10, window_bounds = array<i64: 1, 8, 128>}]} {
    %c0_i32 = arith.constant 0 : i32
    %0 = arith.cmpi eq, %arg1, %c0_i32 : i32
    %1 = arith.extui %0 : i1 to i32
    %c0_i32_0 = arith.constant 0 : i32
    %2 = arith.cmpi ne, %1, %c0_i32_0 : i32
    scf.if %2 {
      %c0_52 = arith.constant 0 : index
      %c0_53 = arith.constant 0 : index
      %c0_54 = arith.constant 0 : index
      %162 = vector.load %arg2[%c0_52, %c0_53, %c0_54] : memref<1x8x32xf32, #tpu.memory_space<vmem>>, vector<1x8x32xf32>
      %163 = vector.shape_cast %162 : vector<1x8x32xf32> to vector<8x32xf32>
      %c0_55 = arith.constant 0 : index
      %c0_56 = arith.constant 0 : index
      %164 = vector.load %arg13[%c0_55, %c0_56] : memref<8x32xf32, #tpu.memory_space<vmem>>, vector<8x32xf32>
      tpu.vector_store %arg13[%c0_55, %c0_56], %163 {strides = array<i32>} : memref<8x32xf32, #tpu.memory_space<vmem>>, vector<8x32xf32>,
    } else {
    }
    %c0 = arith.constant 0 : index
    %c0_1 = arith.constant 0 : index
    %3 = vector.load %arg13[%c0, %c0_1] : memref<8x32xf32, #tpu.memory_space<vmem>>, vector<8x32xf32>
    %c0_2 = arith.constant 0 : index
    %c0_3 = arith.constant 0 : index
    %c0_4 = arith.constant 0 : index
    %4 = vector.load %arg8[%c0_2, %c0_3, %c0_4] : memref<1x8x96xf32, #tpu.memory_space<vmem>>, vector<1x8x96xf32>
    %5 = vector.shape_cast %4 : vector<1x8x96xf32> to vector<8x96xf32>
    %6 = vector.extract_strided_slice %5 {offsets = [0, 0], sizes = [1, 96], strides = [1, 1]} : vector<8x96xf32> to vector<1x96xf32>
    %7 = vector.extract_strided_slice %5 {offsets = [1, 0], sizes = [1, 32], strides = [1, 1]} : vector<8x96xf32> to vector<1x32xf32>
    %8 = vector.extract_strided_slice %5 {offsets = [2, 0], sizes = [1, 32], strides = [1, 1]} : vector<8x96xf32> to vector<1x32xf32>
    %9 = vector.extract_strided_slice %5 {offsets = [3, 0], sizes = [1, 32], strides = [1, 1]} : vector<8x96xf32> to vector<1x32xf32>
    %10 = vector.extract_strided_slice %5 {offsets = [4, 0], sizes = [1, 64], strides = [1, 1]} : vector<8x96xf32> to vector<1x64xf32>
    %11 = vector.extract_strided_slice %5 {offsets = [5, 0], sizes = [1, 32], strides = [1, 1]} : vector<8x96xf32> to vector<1x32xf32>
    %12 = vector.extract_strided_slice %5 {offsets = [6, 0], sizes = [1, 32], strides = [1, 1]} : vector<8x96xf32> to vector<1x32xf32>
    %13 = vector.extract_strided_slice %5 {offsets = [7, 0], sizes = [1, 32], strides = [1, 1]} : vector<8x96xf32> to vector<1x32xf32>
    %14 = arith.truncf %3 : vector<8x32xf32> to vector<8x32xbf16>
    %c0_5 = arith.constant 0 : index
    %c0_6 = arith.constant 0 : index
    %c0_7 = arith.constant 0 : index
    %15 = vector.load %arg4[%c0_5, %c0_6, %c0_7] : memref<1x32x96xbf16, #tpu.memory_space<vmem>>, vector<1x32x96xbf16>
    %16 = vector.shape_cast %15 : vector<1x32x96xbf16> to vector<32x96xbf16>
    %cst = arith.constant dense<0.000000e+00> : vector<8x96xf32>
    %17 = tpu.matmul %14, %16, %cst {dimension_numbers = #tpu.dot_dimension_numbers<[1], [0], [0], [1], [0, 0, 1, 1], [], []>} : vector<8x32xbf16>, vector<32x96xbf16>, vector<8x96xf32> -> vector<8x96xf32>
    %18 = vector.broadcast %6 : vector<1x96xf32> to vector<8x96xf32>
    %19 = arith.addf %17, %18 : vector<8x96xf32>
    %20 = vector.extract_strided_slice %19 {offsets = [0, 0], sizes = [8, 8], strides = [1, 1]} : vector<8x96xf32> to vector<8x8xf32>
    %21 = vector.extract_strided_slice %19 {offsets = [0, 8], sizes = [8, 8], strides = [1, 1]} : vector<8x96xf32> to vector<8x8xf32>
    %22 = vector.extract_strided_slice %19 {offsets = [0, 16], sizes = [8, 8], strides = [1, 1]} : vector<8x96xf32> to vector<8x8xf32>
    %23 = vector.extract_strided_slice %19 {offsets = [0, 24], sizes = [8, 8], strides = [1, 1]} : vector<8x96xf32> to vector<8x8xf32>
    %24 = vector.shape_cast %20 : vector<8x8xf32> to vector<1x8x8xf32>
    %25 = vector.shape_cast %21 : vector<8x8xf32> to vector<1x8x8xf32>
    %26 = vector.shape_cast %22 : vector<8x8xf32> to vector<1x8x8xf32>
    %27 = vector.shape_cast %23 : vector<8x8xf32> to vector<1x8x8xf32>
    %28 = tpu.concatenate %24, %25, %26, %27 in 0 : vector<1x8x8xf32>, vector<1x8x8xf32>, vector<1x8x8xf32>, vector<1x8x8xf32> -> vector<4x8x8xf32>
    %29 = vector.extract_strided_slice %19 {offsets = [0, 32], sizes = [8, 8], strides = [1, 1]} : vector<8x96xf32> to vector<8x8xf32>
    %30 = vector.extract_strided_slice %19 {offsets = [0, 40], sizes = [8, 8], strides = [1, 1]} : vector<8x96xf32> to vector<8x8xf32>
    %31 = vector.extract_strided_slice %19 {offsets = [0, 48], sizes = [8, 8], strides = [1, 1]} : vector<8x96xf32> to vector<8x8xf32>
    %32 = vector.extract_strided_slice %19 {offsets = [0, 56], sizes = [8, 8], strides = [1, 1]} : vector<8x96xf32> to vector<8x8xf32>
    %33 = vector.shape_cast %29 : vector<8x8xf32> to vector<1x8x8xf32>
    %34 = vector.shape_cast %30 : vector<8x8xf32> to vector<1x8x8xf32>
    %35 = vector.shape_cast %31 : vector<8x8xf32> to vector<1x8x8xf32>
    %36 = vector.shape_cast %32 : vector<8x8xf32> to vector<1x8x8xf32>
    %37 = tpu.concatenate %33, %34, %35, %36 in 0 : vector<1x8x8xf32>, vector<1x8x8xf32>, vector<1x8x8xf32>, vector<1x8x8xf32> -> vector<4x8x8xf32>
    %38 = vector.extract_strided_slice %19 {offsets = [0, 64], sizes = [8, 8], strides = [1, 1]} : vector<8x96xf32> to vector<8x8xf32>
    %39 = vector.extract_strided_slice %19 {offsets = [0, 72], sizes = [8, 8], strides = [1, 1]} : vector<8x96xf32> to vector<8x8xf32>
    %40 = vector.extract_strided_slice %19 {offsets = [0, 80], sizes = [8, 8], strides = [1, 1]} : vector<8x96xf32> to vector<8x8xf32>
    %41 = vector.extract_strided_slice %19 {offsets = [0, 88], sizes = [8, 8], strides = [1, 1]} : vector<8x96xf32> to vector<8x8xf32>
    %42 = vector.shape_cast %38 : vector<8x8xf32> to vector<1x8x8xf32>
    %43 = vector.shape_cast %39 : vector<8x8xf32> to vector<1x8x8xf32>
    %44 = vector.shape_cast %40 : vector<8x8xf32> to vector<1x8x8xf32>
    %45 = vector.shape_cast %41 : vector<8x8xf32> to vector<1x8x8xf32>
    %46 = tpu.concatenate %42, %43, %44, %45 in 0 : vector<1x8x8xf32>, vector<1x8x8xf32>, vector<1x8x8xf32>, vector<1x8x8xf32> -> vector<4x8x8xf32>
    %c0_8 = arith.constant 0 : index
    %c0_9 = arith.constant 0 : index
    %c0_10 = arith.constant 0 : index
    %c0_11 = arith.constant 0 : index
    %47 = vector.load %arg3[%c0_8, %c0_9, %c0_10, %c0_11] : memref<4x1x1x8xf32, #tpu.memory_space<vmem>>, vector<4x1x1x8xf32>
    %48 = vector.shape_cast %47 : vector<4x1x1x8xf32> to vector<4x1x8xf32>
    %49 = vector.shape_cast %48 : vector<4x1x8xf32> to vector<4x1x8xf32>
    %50 = vector.broadcast %49 : vector<4x1x8xf32> to vector<4x8x8xf32>
    %51 = arith.truncf %28 : vector<4x8x8xf32> to vector<4x8x8xbf16>
    %52 = arith.truncf %37 : vector<4x8x8xf32> to vector<4x8x8xbf16>
    "tpu.trace_start"() <{level = 10 : i32, message = "bqd,bkd->bqk"}> : () -> ()
    %cst_12 = arith.constant dense<0.000000e+00> : vector<4x8x8xf32>
    %53 = tpu.matmul %51, %52, %cst_12 {dimension_numbers = #tpu.dot_dimension_numbers<[2], [2], [1], [1], [0, 0, 0, 1, 1, 1], [0], [0]>} : vector<4x8x8xbf16>, vector<4x8x8xbf16>, vector<4x8x8xf32> -> vector<4x8x8xf32>
    "tpu.trace_stop"() : () -> ()
    %54 = arith.addf %53, %50 : vector<4x8x8xf32>
    %cst_13 = arith.constant dense<0xFF800000> : vector<4x8xf32>
    %55 = vector.multi_reduction <maximumf>, %54, %cst_13 [2] : vector<4x8x8xf32> to vector<4x8xf32>
    %56 = vector.shape_cast %55 : vector<4x8xf32> to vector<4x8x1xf32>
    %57 = vector.broadcast %56 : vector<4x8x1xf32> to vector<4x8x8xf32>
    %58 = arith.subf %54, %57 : vector<4x8x8xf32>
    %59 = math.exp %58 : vector<4x8x8xf32>
    %cst_14 = arith.constant dense<0.000000e+00> : vector<4x8xf32>
    %60 = vector.multi_reduction <add>, %59, %cst_14 [2] : vector<4x8x8xf32> to vector<4x8xf32>
    %61 = vector.shape_cast %60 : vector<4x8xf32> to vector<4x8x1xf32>
    %62 = tpu.reciprocal %61 {approx = true} : vector<4x8x1xf32> -> vector<4x8x1xf32>
    %63 = vector.broadcast %62 : vector<4x8x1xf32> to vector<4x8x8xf32>
    %64 = arith.mulf %59, %63 : vector<4x8x8xf32>
    %65 = arith.truncf %64 : vector<4x8x8xf32> to vector<4x8x8xbf16>
    %66 = arith.truncf %46 : vector<4x8x8xf32> to vector<4x8x8xbf16>
    "tpu.trace_start"() <{level = 10 : i32, message = "bqk,bkd->bqd"}> : () -> ()
    %cst_15 = arith.constant dense<0.000000e+00> : vector<4x8x8xf32>
    %67 = tpu.matmul %65, %66, %cst_15 {dimension_numbers = #tpu.dot_dimension_numbers<[2], [1], [1], [2], [0, 0, 0, 1, 1, 2], [0], [0]>} : vector<4x8x8xbf16>, vector<4x8x8xbf16>, vector<4x8x8xf32> -> vector<4x8x8xf32>
    "tpu.trace_stop"() : () -> ()
    %68 = vector.extract_strided_slice %67 {offsets = [0, 0, 0], sizes = [1, 8, 8], strides = [1, 1, 1]} : vector<4x8x8xf32> to vector<1x8x8xf32>
    %69 = vector.shape_cast %68 : vector<1x8x8xf32> to vector<8x8xf32>
    %c0_16 = arith.constant 0 : index
    %c0_17 = arith.constant 0 : index
    %70 = vector.load %arg14[%c0_16, %c0_17] : memref<8x32xf32, #tpu.memory_space<vmem>>, vector<8x8xf32>
    tpu.vector_store %arg14[%c0_16, %c0_17], %69 {strides = array<i32>} : memref<8x32xf32, #tpu.memory_space<vmem>>, vector<8x8xf32>,
    %71 = vector.extract_strided_slice %67 {offsets = [1, 0, 0], sizes = [1, 8, 8], strides = [1, 1, 1]} : vector<4x8x8xf32> to vector<1x8x8xf32>
    %72 = vector.shape_cast %71 : vector<1x8x8xf32> to vector<8x8xf32>
    %c0_18 = arith.constant 0 : index
    %c8 = arith.constant 8 : index
    %73 = vector.load %arg14[%c0_18, %c8] : memref<8x32xf32, #tpu.memory_space<vmem>>, vector<8x8xf32>
    tpu.vector_store %arg14[%c0_18, %c8], %72 {strides = array<i32>} : memref<8x32xf32, #tpu.memory_space<vmem>>, vector<8x8xf32>,
    %74 = vector.extract_strided_slice %67 {offsets = [2, 0, 0], sizes = [1, 8, 8], strides = [1, 1, 1]} : vector<4x8x8xf32> to vector<1x8x8xf32>
    %75 = vector.shape_cast %74 : vector<1x8x8xf32> to vector<8x8xf32>
    %c0_19 = arith.constant 0 : index
    %c16 = arith.constant 16 : index
    %76 = vector.load %arg14[%c0_19, %c16] : memref<8x32xf32, #tpu.memory_space<vmem>>, vector<8x8xf32>
    tpu.vector_store %arg14[%c0_19, %c16], %75 {strides = array<i32>} : memref<8x32xf32, #tpu.memory_space<vmem>>, vector<8x8xf32>,
    %77 = vector.extract_strided_slice %67 {offsets = [3, 0, 0], sizes = [1, 8, 8], strides = [1, 1, 1]} : vector<4x8x8xf32> to vector<1x8x8xf32>
    %78 = vector.shape_cast %77 : vector<1x8x8xf32> to vector<8x8xf32>
    %c0_20 = arith.constant 0 : index
    %c24 = arith.constant 24 : index
    %79 = vector.load %arg14[%c0_20, %c24] : memref<8x32xf32, #tpu.memory_space<vmem>>, vector<8x8xf32>
    tpu.vector_store %arg14[%c0_20, %c24], %78 {strides = array<i32>} : memref<8x32xf32, #tpu.memory_space<vmem>>, vector<8x8xf32>,
    %c0_21 = arith.constant 0 : index
    %c0_22 = arith.constant 0 : index
    %80 = vector.load %arg14[%c0_21, %c0_22] : memref<8x32xf32, #tpu.memory_space<vmem>>, vector<8x32xf32>
    %81 = arith.truncf %80 : vector<8x32xf32> to vector<8x32xbf16>
    %c0_23 = arith.constant 0 : index
    %c0_24 = arith.constant 0 : index
    %c0_25 = arith.constant 0 : index
    %82 = vector.load %arg5[%c0_23, %c0_24, %c0_25] : memref<1x32x32xbf16, #tpu.memory_space<vmem>>, vector<1x32x32xbf16>
    %83 = vector.shape_cast %82 : vector<1x32x32xbf16> to vector<32x32xbf16>
    %cst_26 = arith.constant dense<0.000000e+00> : vector<8x32xf32>
    %84 = tpu.matmul %81, %83, %cst_26 {dimension_numbers = #tpu.dot_dimension_numbers<[1], [0], [0], [1], [0, 0, 1, 1], [], []>} : vector<8x32xbf16>, vector<32x32xbf16>, vector<8x32xf32> -> vector<8x32xf32>
    %85 = vector.broadcast %7 : vector<1x32xf32> to vector<8x32xf32>
    %86 = arith.addf %84, %85 : vector<8x32xf32>
    %87 = arith.addf %3, %86 : vector<8x32xf32>
    %cst_27 = arith.constant dense<0.000000e+00> : vector<8xf32>
    %88 = vector.multi_reduction <add>, %87, %cst_27 [1] : vector<8x32xf32> to vector<8xf32>
    %89 = vector.shape_cast %88 : vector<8xf32> to vector<8x1xf32>
    %cst_28 = arith.constant 3.200000e+01 : f32
    %90 = vector.broadcast %cst_28 : f32 to vector<8x1xf32>
    %91 = arith.divf %89, %90 : vector<8x1xf32>
    %92 = vector.broadcast %91 : vector<8x1xf32> to vector<8x32xf32>
    %93 = arith.subf %87, %92 : vector<8x32xf32>
    %94 = arith.mulf %93, %93 : vector<8x32xf32>
    %cst_29 = arith.constant dense<0.000000e+00> : vector<8xf32>
    %95 = vector.multi_reduction <add>, %94, %cst_29 [1] : vector<8x32xf32> to vector<8xf32>
    %96 = vector.shape_cast %95 : vector<8xf32> to vector<8x1xf32>
    %cst_30 = arith.constant 3.200000e+01 : f32
    %97 = vector.broadcast %cst_30 : f32 to vector<8x1xf32>
    %98 = arith.divf %96, %97 : vector<8x1xf32>
    %99 = vector.broadcast %91 : vector<8x1xf32> to vector<8x32xf32>
    %100 = arith.subf %87, %99 : vector<8x32xf32>
    %cst_31 = arith.constant 9.99999996E-13 : f32
    %101 = vector.broadcast %cst_31 : f32 to vector<8x1xf32>
    %102 = arith.addf %98, %101 : vector<8x1xf32>
    %103 = math.rsqrt %102 : vector<8x1xf32>
    %104 = vector.broadcast %103 : vector<8x1xf32> to vector<8x32xf32>
    %105 = arith.mulf %100, %104 : vector<8x32xf32>
    %106 = vector.broadcast %8 : vector<1x32xf32> to vector<8x32xf32>
    %107 = arith.mulf %105, %106 : vector<8x32xf32>
    %108 = vector.broadcast %9 : vector<1x32xf32> to vector<8x32xf32>
    %109 = arith.addf %107, %108 : vector<8x32xf32>
    %110 = arith.truncf %109 : vector<8x32xf32> to vector<8x32xbf16>
    %c0_32 = arith.constant 0 : index
    %c0_33 = arith.constant 0 : index
    %c0_34 = arith.constant 0 : index
    %111 = vector.load %arg6[%c0_32, %c0_33, %c0_34] : memref<1x32x64xbf16, #tpu.memory_space<vmem>>, vector<1x32x64xbf16>
    %112 = vector.shape_cast %111 : vector<1x32x64xbf16> to vector<32x64xbf16>
    %cst_35 = arith.constant dense<0.000000e+00> : vector<8x64xf32>
    %113 = tpu.matmul %110, %112, %cst_35 {dimension_numbers = #tpu.dot_dimension_numbers<[1], [0], [0], [1], [0, 0, 1, 1], [], []>} : vector<8x32xbf16>, vector<32x64xbf16>, vector<8x64xf32> -> vector<8x64xf32>
    %114 = vector.broadcast %10 : vector<1x64xf32> to vector<8x64xf32>
    %115 = arith.addf %113, %114 : vector<8x64xf32>
    %116 = arith.mulf %115, %115 : vector<8x64xf32>
    %117 = arith.mulf %115, %116 : vector<8x64xf32>
    %cst_36 = arith.constant 4.471500e-02 : f32
    %118 = vector.broadcast %cst_36 : f32 to vector<8x64xf32>
    %119 = arith.mulf %118, %117 : vector<8x64xf32>
    %120 = arith.addf %115, %119 : vector<8x64xf32>
    %cst_37 = arith.constant 0.797884583 : f32
    %121 = vector.broadcast %cst_37 : f32 to vector<8x64xf32>
    %122 = arith.mulf %121, %120 : vector<8x64xf32>
    %123 = math.tanh %122 : vector<8x64xf32>
    %cst_38 = arith.constant 1.000000e+00 : f32
    %124 = vector.broadcast %cst_38 : f32 to vector<8x64xf32>
    %125 = arith.addf %124, %123 : vector<8x64xf32>
    %cst_39 = arith.constant 5.000000e-01 : f32
    %126 = vector.broadcast %cst_39 : f32 to vector<8x64xf32>
    %127 = arith.mulf %126, %125 : vector<8x64xf32>
    %128 = arith.mulf %115, %127 : vector<8x64xf32>
    %129 = arith.truncf %128 : vector<8x64xf32> to vector<8x64xbf16>
    %c0_40 = arith.constant 0 : index
    %c0_41 = arith.constant 0 : index
    %c0_42 = arith.constant 0 : index
    %130 = vector.load %arg7[%c0_40, %c0_41, %c0_42] : memref<1x64x32xbf16, #tpu.memory_space<vmem>>, vector<1x64x32xbf16>
    %131 = vector.shape_cast %130 : vector<1x64x32xbf16> to vector<64x32xbf16>
    %cst_43 = arith.constant dense<0.000000e+00> : vector<8x32xf32>
    %132 = tpu.matmul %129, %131, %cst_43 {dimension_numbers = #tpu.dot_dimension_numbers<[1], [0], [0], [1], [0, 0, 1, 1], [], []>} : vector<8x64xbf16>, vector<64x32xbf16>, vector<8x32xf32> -> vector<8x32xf32>
    %133 = vector.broadcast %11 : vector<1x32xf32> to vector<8x32xf32>
    %134 = arith.addf %132, %133 : vector<8x32xf32>
    %135 = arith.addf %109, %134 : vector<8x32xf32>
    %cst_44 = arith.constant dense<0.000000e+00> : vector<8xf32>
    %136 = vector.multi_reduction <add>, %135, %cst_44 [1] : vector<8x32xf32> to vector<8xf32>
    %137 = vector.shape_cast %136 : vector<8xf32> to vector<8x1xf32>
    %cst_45 = arith.constant 3.200000e+01 : f32
    %138 = vector.broadcast %cst_45 : f32 to vector<8x1xf32>
    %139 = arith.divf %137, %138 : vector<8x1xf32>
    %140 = vector.broadcast %139 : vector<8x1xf32> to vector<8x32xf32>
    %141 = arith.subf %135, %140 : vector<8x32xf32>
    %142 = arith.mulf %141, %141 : vector<8x32xf32>
    %cst_46 = arith.constant dense<0.000000e+00> : vector<8xf32>
    %143 = vector.multi_reduction <add>, %142, %cst_46 [1] : vector<8x32xf32> to vector<8xf32>
    %144 = vector.shape_cast %143 : vector<8xf32> to vector<8x1xf32>
    %cst_47 = arith.constant 3.200000e+01 : f32
    %145 = vector.broadcast %cst_47 : f32 to vector<8x1xf32>
    %146 = arith.divf %144, %145 : vector<8x1xf32>
    %147 = vector.broadcast %139 : vector<8x1xf32> to vector<8x32xf32>
    %148 = arith.subf %135, %147 : vector<8x32xf32>
    %cst_48 = arith.constant 9.99999996E-13 : f32
    %149 = vector.broadcast %cst_48 : f32 to vector<8x1xf32>
    %150 = arith.addf %146, %149 : vector<8x1xf32>
    %151 = math.rsqrt %150 : vector<8x1xf32>
    %152 = vector.broadcast %151 : vector<8x1xf32> to vector<8x32xf32>
    %153 = arith.mulf %148, %152 : vector<8x32xf32>
    %154 = vector.broadcast %12 : vector<1x32xf32> to vector<8x32xf32>
    %155 = arith.mulf %153, %154 : vector<8x32xf32>
    %156 = vector.broadcast %13 : vector<1x32xf32> to vector<8x32xf32>
    %157 = arith.addf %155, %156 : vector<8x32xf32>
    %c0_49 = arith.constant 0 : index
    %c0_50 = arith.constant 0 : index
    %158 = vector.load %arg13[%c0_49, %c0_50] : memref<8x32xf32, #tpu.memory_space<vmem>>, vector<8x32xf32>
    tpu.vector_store %arg13[%c0_49, %c0_50], %157 {strides = array<i32>} : memref<8x32xf32, #tpu.memory_space<vmem>>, vector<8x32xf32>,
    %c1_i32 = arith.constant 1 : i32
    %159 = arith.cmpi eq, %arg1, %c1_i32 : i32
    %160 = arith.extui %159 : i1 to i32
    %c0_i32_51 = arith.constant 0 : i32
    %161 = arith.cmpi ne, %160, %c0_i32_51 : i32
    scf.if %161 {
      %c0_52 = arith.constant 0 : index
      %c0_53 = arith.constant 0 : index
      %162 = vector.load %arg13[%c0_52, %c0_53] : memref<8x32xf32, #tpu.memory_space<vmem>>, vector<1x32xf32>
      %c0_54 = arith.constant 0 : index
      %c0_55 = arith.constant 0 : index
      %163 = vector.load %arg11[%c0_54, %c0_55] : memref<8x128xf32, #tpu.memory_space<vmem>>, vector<8x128xf32>
      %164 = vector.extract_strided_slice %163 {offsets = [0, 0], sizes = [1, 32], strides = [1, 1]} : vector<8x128xf32> to vector<1x32xf32>
      %165 = arith.mulf %162, %164 : vector<1x32xf32>
      %166 = vector.extract_strided_slice %163 {offsets = [1, 0], sizes = [1, 32], strides = [1, 1]} : vector<8x128xf32> to vector<1x32xf32>
      %167 = arith.addf %165, %166 : vector<1x32xf32>
      %cst_56 = arith.constant 0.000000e+00 : f32
      %168 = vector.broadcast %cst_56 : f32 to vector<1x32xf32>
      %169 = arith.maximumf %167, %168 : vector<1x32xf32>
      %170 = arith.truncf %169 : vector<1x32xf32> to vector<1x32xbf16>
      %c0_57 = arith.constant 0 : index
      %c0_58 = arith.constant 0 : index
      %171 = vector.load %arg9[%c0_57, %c0_58] : memref<32x64xbf16, #tpu.memory_space<vmem>>, vector<32x64xbf16>
      %cst_59 = arith.constant dense<0.000000e+00> : vector<1x64xf32>
      %172 = tpu.matmul %170, %171, %cst_59 {dimension_numbers = #tpu.dot_dimension_numbers<[1], [0], [0], [1], [0, 0, 1, 1], [], []>} : vector<1x32xbf16>, vector<32x64xbf16>, vector<1x64xf32> -> vector<1x64xf32>
      %173 = vector.extract_strided_slice %163 {offsets = [2, 0], sizes = [1, 64], strides = [1, 1]} : vector<8x128xf32> to vector<1x64xf32>
      %174 = arith.addf %172, %173 : vector<1x64xf32>
      %cst_60 = arith.constant 0.000000e+00 : f32
      %175 = vector.broadcast %cst_60 : f32 to vector<1x64xf32>
      %176 = arith.maximumf %174, %175 : vector<1x64xf32>
      %177 = arith.truncf %176 : vector<1x64xf32> to vector<1x64xbf16>
      %c0_61 = arith.constant 0 : index
      %c0_62 = arith.constant 0 : index
      %178 = vector.load %arg10[%c0_61, %c0_62] : memref<64x128xbf16, #tpu.memory_space<vmem>>, vector<64x128xbf16>
      %cst_63 = arith.constant dense<0.000000e+00> : vector<1x128xf32>
      %179 = tpu.matmul %177, %178, %cst_63 {dimension_numbers = #tpu.dot_dimension_numbers<[1], [0], [0], [1], [0, 0, 1, 1], [], []>} : vector<1x64xbf16>, vector<64x128xbf16>, vector<1x128xf32> -> vector<1x128xf32>
      %180 = vector.extract_strided_slice %163 {offsets = [3, 0], sizes = [1, 128], strides = [1, 1]} : vector<8x128xf32> to vector<1x128xf32>
      %181 = arith.addf %179, %180 : vector<1x128xf32>
      %cst_64 = arith.constant 0.000000e+00 : f32
      %182 = vector.broadcast %cst_64 : f32 to vector<1x128xf32>
      %183 = arith.maximumf %181, %182 : vector<1x128xf32>
      %184 = vector.shape_cast %183 : vector<1x128xf32> to vector<1x1x128xf32>
      %185 = vector.shape_cast %184 : vector<1x1x128xf32> to vector<1x1x128xf32>
      %186 = vector.broadcast %185 : vector<1x1x128xf32> to vector<1x8x128xf32>
      %c0_65 = arith.constant 0 : index
      %c0_66 = arith.constant 0 : index
      %c0_67 = arith.constant 0 : index
      %187 = vector.load %arg12[%c0_65, %c0_66, %c0_67] : memref<1x8x128xf32, #tpu.memory_space<vmem>>, vector<1x8x128xf32>
      tpu.vector_store %arg12[%c0_65, %c0_66, %c0_67], %186 {strides = array<i32>} : memref<1x8x128xf32, #tpu.memory_space<vmem>>, vector<1x8x128xf32>,
    } else {
    }
    return
  }
  func.func @transform_0(%arg0: i32, %arg1: i32) -> (i32, i32, i32) {
    %c0_i32 = arith.constant 0 : i32
    %c0_i32_0 = arith.constant 0 : i32
    %c0_i32_1 = arith.constant 0 : i32
    return %arg0, %c0_i32, %c0_i32_0 : i32, i32, i32
  }
  func.func @transform_1(%arg0: i32, %arg1: i32) -> (i32, i32, i32, i32) {
    %c0_i32 = arith.constant 0 : i32
    %c0_i32_0 = arith.constant 0 : i32
    %c0_i32_1 = arith.constant 0 : i32
    %c0_i32_2 = arith.constant 0 : i32
    return %c0_i32, %arg0, %c0_i32_0, %c0_i32_1 : i32, i32, i32, i32
  }
  func.func @transform_2(%arg0: i32, %arg1: i32) -> (i32, i32, i32) {
    %c0_i32 = arith.constant 0 : i32
    %c0_i32_0 = arith.constant 0 : i32
    %c0_i32_1 = arith.constant 0 : i32
    return %arg1, %c0_i32, %c0_i32_0 : i32, i32, i32
  }
  func.func @transform_3(%arg0: i32, %arg1: i32) -> (i32, i32, i32) {
    %c0_i32 = arith.constant 0 : i32
    %c0_i32_0 = arith.constant 0 : i32
    %c0_i32_1 = arith.constant 0 : i32
    return %arg1, %c0_i32, %c0_i32_0 : i32, i32, i32
  }
  func.func @transform_4(%arg0: i32, %arg1: i32) -> (i32, i32, i32) {
    %c0_i32 = arith.constant 0 : i32
    %c0_i32_0 = arith.constant 0 : i32
    %c0_i32_1 = arith.constant 0 : i32
    return %arg1, %c0_i32, %c0_i32_0 : i32, i32, i32
  }
  func.func @transform_5(%arg0: i32, %arg1: i32) -> (i32, i32, i32) {
    %c0_i32 = arith.constant 0 : i32
    %c0_i32_0 = arith.constant 0 : i32
    %c0_i32_1 = arith.constant 0 : i32
    return %arg1, %c0_i32, %c0_i32_0 : i32, i32, i32
  }
  func.func @transform_6(%arg0: i32, %arg1: i32) -> (i32, i32, i32) {
    %c0_i32 = arith.constant 0 : i32
    %c0_i32_0 = arith.constant 0 : i32
    %c0_i32_1 = arith.constant 0 : i32
    return %arg1, %c0_i32, %c0_i32_0 : i32, i32, i32
  }
  func.func @transform_7(%arg0: i32, %arg1: i32) -> (i32, i32) {
    %c0_i32 = arith.constant 0 : i32
    %c0_i32_0 = arith.constant 0 : i32
    %c0_i32_1 = arith.constant 0 : i32
    return %c0_i32, %c0_i32_0 : i32, i32
  }
  func.func @transform_8(%arg0: i32, %arg1: i32) -> (i32, i32) {
    %c0_i32 = arith.constant 0 : i32
    %c0_i32_0 = arith.constant 0 : i32
    %c0_i32_1 = arith.constant 0 : i32
    return %c0_i32, %c0_i32_0 : i32, i32
  }
  func.func @transform_9(%arg0: i32, %arg1: i32) -> (i32, i32) {
    %c0_i32 = arith.constant 0 : i32
    %c0_i32_0 = arith.constant 0 : i32
    %c0_i32_1 = arith.constant 0 : i32
    return %c0_i32, %c0_i32_0 : i32, i32
  }
  func.func @transform_10(%arg0: i32, %arg1: i32) -> (i32, i32, i32) {
    %c0_i32 = arith.constant 0 : i32
    %c0_i32_0 = arith.constant 0 : i32
    %c0_i32_1 = arith.constant 0 : i32
    return %arg0, %c0_i32, %c0_i32_0 : i32, i32, i32
  }
}

</mosaic_0001>

<llo_original>
// kernel: bert_classification_forward.1
$region0: #{bert_classification_forward.1}
  #allocation0 [shape = 'u32[]', space=smem, size = 0x4, offset = 0x4, fixed_abs, tag = 'smem constant byte address 0x4 - core index']
  #allocation1 [shape = 'u32[144,128]{1,0:T(1,128)}', space=vmem, size = 0x12000, scoped, tag = 'internal scratch']
  #allocation2 [shape = 'f32[8,32]{1,0:T(8,128)}', space=vmem, size = 0x1000, scoped, tag = 'scratch operand']
  #allocation3 [shape = 'f32[8,32]{1,0:T(8,128)}', space=vmem, size = 0x1000, scoped, tag = 'scratch operand']
  %s0 = inlined_call_operand.hbm [shape: f32[2,8,32], index: 0, kind: input, shape index: {}]
  %s1 = inlined_call_operand.hbm [shape: f32[4,2,1,8], index: 1, kind: input, shape index: {}]
  %s2 = inlined_call_operand.hbm [shape: bf16[2,32,96], index: 2, kind: input, shape index: {}]
  %s3 = inlined_call_operand.hbm [shape: bf16[2,32,32], index: 3, kind: input, shape index: {}]
  %s4 = inlined_call_operand.hbm [shape: bf16[2,32,64], index: 4, kind: input, shape index: {}]
  %s5 = inlined_call_operand.hbm [shape: bf16[2,64,32], index: 5, kind: input, shape index: {}]
  %s6 = inlined_call_operand.hbm [shape: f32[2,8,96], index: 6, kind: input, shape index: {}]
  %s7 = inlined_call_operand.hbm [shape: bf16[32,64], index: 7, kind: input, shape index: {}]
  %s8 = inlined_call_operand.hbm [shape: bf16[64,128], index: 8, kind: input, shape index: {}]
  %s9 = inlined_call_operand.hbm [shape: f32[8,128], index: 9, kind: input, shape index: {}]
  %s10 = inlined_call_operand.hbm [shape: f32[2,8,128], index: 10, kind: output, shape index: {}]
  %s11 = sld [smem:[#allocation0]]
  $region121: #{bert_classification_forward.1} parent=0
    _
  %s13 = ssub.s32 1, %s11
  %s14 = scalar_select 0, %s13, %s11
  $region1: #{bert_classification_forward.1} parent=0
    #allocation4 [shape = 'u8[8192]{0}', space=vmem, size = 0x2000, scoped, tag = 'input window, operand 0']
    #allocation5 [shape = 's32[2]{0}', space=sflag, size = 0x8, scoped, tag = 'scoped memory for bert_classification_forward.1']
    #allocation6 [shape = 's32[2]{0}', space=sflag, size = 0x8, scoped, tag = 'scoped memory for bert_classification_forward.1']
    #allocation7 [shape = 'u8[4096]{0}', space=vmem, size = 0x1000, scoped, tag = 'input window, operand 1']
    #allocation8 [shape = 's32[2]{0}', space=sflag, size = 0x8, scoped, tag = 'scoped memory for bert_classification_forward.1']
    #allocation9 [shape = 'u8[16384]{0}', space=vmem, size = 0x4000, scoped, tag = 'input window, operand 2']
    #allocation10 [shape = 'u8[16384]{0}', space=vmem, size = 0x4000, scoped, tag = 'input window, operand 3']
    #allocation11 [shape = 's32[2]{0}', space=sflag, size = 0x8, scoped, tag = 'scoped memory for bert_classification_forward.1']
    #allocation12 [shape = 'u8[16384]{0}', space=vmem, size = 0x4000, scoped, tag = 'input window, operand 4']
    #allocation13 [shape = 'u8[32768]{0}', space=vmem, size = 0x8000, scoped, tag = 'input window, operand 5']
    #allocation14 [shape = 's32[2]{0}', space=sflag, size = 0x8, scoped, tag = 'scoped memory for bert_classification_forward.1']
    #allocation15 [shape = 'u8[8192]{0}', space=vmem, size = 0x2000, scoped, tag = 'input window, operand 6']
    #allocation16 [shape = 'u8[8192]{0}', space=vmem, size = 0x2000, scoped, tag = 'input window, operand 7, single buffered']
    #allocation17 [shape = 's32[1]{0}', space=sflag, size = 0x4, scoped, tag = 'scoped memory for bert_classification_forward.1']
    #allocation18 [shape = 'u8[16384]{0}', space=vmem, size = 0x4000, scoped, tag = 'input window, operand 8, single buffered']
    #allocation19 [shape = 'u8[4096]{0}', space=vmem, size = 0x1000, scoped, tag = 'input window, operand 9, single buffered']
    #allocation20 [shape = 's32[1]{0}', space=sflag, size = 0x4, scoped, tag = 'scoped memory for bert_classification_forward.1']
    #allocation21 [shape = 'u8[8192]{0}', space=vmem, size = 0x2000, scoped, tag = 'output window, operand 0']
    %15 = vsyncpa [#allocation5], 0
    %s16 = scalar_lea.sflag [#allocation5], 1
    %17 = vsyncpa %s16, 0
    %18 = vsyncpa [#allocation8], 0
    %s19 = scalar_lea.sflag [#allocation8], 1
    %20 = vsyncpa %s19, 0
    %21 = vsyncpa [#allocation11], 0
    %s22 = scalar_lea.sflag [#allocation11], 1
    %23 = vsyncpa %s22, 0
    %24 = vsyncpa [#allocation14], 0
    %s25 = scalar_lea.sflag [#allocation14], 1
    %26 = vsyncpa %s25, 0
    %27 = vsyncpa [#allocation17], 0
    %28 = vsyncpa [#allocation20], 0
    %29 = vsyncpa [#allocation6], 0
    %s30 = scalar_lea.sflag [#allocation6], 1
    %31 = vsyncpa %s30, 0
    loop: start=0, step=1, limit=6
    $region2: #{bert_classification_forward.1} parent=1 // loop_pre_header
      _
    $region3: #{bert_classification_forward.1} parent=1 // loop_header
      %s33 = sphi 0, %s37
      %p34 = scmp.ge.s32.totalorder %s33, 6
      %s40 = sphi 0, %s52
      %s41 = sphi 0, %s48
      %s42 = sphi 0, %s40
      %s43 = sphi 0, %s41
      %s44 = sphi 0, %s42
      %s45 = sphi 0, %s43
      %s55 = sphi 0, %s57
      %s58 = sphi 0, %s55
      %s59 = sphi 0, %s58
      %s75 = sphi 0, %s59
      %s81 = sphi 0, %s83
      %s84 = sphi 0, %s81
      %s85 = sphi 0, %s84
      %s101 = sphi 0, %s85
      %s107 = sphi 0, %s109
      %s110 = sphi 0, %s107
      %s111 = sphi 0, %s110
      %s127 = sphi 0, %s111
      %s133 = sphi 0, %s135
      %s136 = sphi 0, %s133
      %s137 = sphi 0, %s136
      %s153 = sphi 0, %s137
      %s159 = sphi 0, %s161
      %s162 = sphi 0, %s159
      %s163 = sphi 0, %s162
      %s179 = sphi 0, %s163
      %s185 = sphi 0, %s187
      %s188 = sphi 0, %s185
      %s189 = sphi 0, %s188
      %s205 = sphi 0, %s189
      %s211 = sphi 0, %s213
      %s214 = sphi 0, %s211
      %s215 = sphi 0, %s214
      %s231 = sphi 0, %s215
      %s235 = sphi 0, %s235
      %s237 = sphi 0, %s235
      %s238 = sphi 0, %s237
      %s252 = sphi 0, %s238
      %s256 = sphi 0, %s256
      %s258 = sphi 0, %s256
      %s259 = sphi 0, %s258
      %s273 = sphi 0, %s259
      %s277 = sphi 0, %s277
      %s279 = sphi 0, %s277
      %s280 = sphi 0, %s279
      %s294 = sphi 0, %s280
      %s300 = sphi 0, %s302
      %s303 = sphi 0, %s300
      %s304 = sphi 0, %s303
      %s320 = sphi 0, %s304
    $region4: #{bert_classification_forward.1} parent=1 // loop_header_branch
      %36 = sbr.rel (%p34) target = $region8
    $region5: #{bert_classification_forward.1} parent=1 // loop_body
      %s38 = ssub.s32 %s33, 1
      %s39 = ssub.s32 %s33, 2
      %s46 = sadd.s32 1, %s41
      %p47 = scmp.ge.s32.totalorder %s46, 2
      %s48 = scalar_select %p47, 0, %s46
      %s49 = sadd.s32 1, %s40
      %s50 = scalar_select %p47, %s49, %s40
      %p51 = scmp.ge.s32.totalorder %s50, 2
      %s52 = scalar_select %p51, 0, %s50
      %s53 = ssub.s32 %s40, %s52
      %p54 = scmp.eq.s32.totalorder %s53, 0
      %s56 = sadd.s32 %s55, 1
      %s57 = scalar_select %p54, %s55, %s56
      %p60 = pneg %p54
      %p61 = scmp.eq.s32.totalorder %s33, 3
      %p62 = por %p60, %p61
      %p63 = scmp.ne.s32.totalorder %s55, %s58
      %p64 = scmp.eq.s32.totalorder %s33, 0
      %p65 = por %p63, %p64
      %p66 = scmp.ne.s32.totalorder %s55, %s58
      %p67 = scmp.eq.s32.totalorder %s38, 3
      %p68 = por %p66, %p67
      %p69 = scmp.ne.s32.totalorder %s58, %s59
      %p70 = scmp.eq.s32.totalorder %s38, 0
      %p71 = por %p69, %p70
      %p72 = scmp.ne.s32.totalorder %s58, %s59
      %p73 = scmp.eq.s32.totalorder %s39, 3
      %p74 = por %p72, %p73
      %p76 = scmp.ne.s32.totalorder %s59, %s75
      %p77 = scmp.eq.s32.totalorder %s39, 0
      %p78 = por %p76, %p77
      %s79 = ssub.s32 %s40, %s52
      %p80 = scmp.eq.s32.totalorder %s79, 0
      %s82 = sadd.s32 %s81, 1
      %s83 = scalar_select %p80, %s81, %s82
      %p86 = pneg %p80
      %p87 = scmp.eq.s32.totalorder %s33, 3
      %p88 = por %p86, %p87
      %p89 = scmp.ne.s32.totalorder %s81, %s84
      %p90 = scmp.eq.s32.totalorder %s33, 0
      %p91 = por %p89, %p90
      %p92 = scmp.ne.s32.totalorder %s81, %s84
      %p93 = scmp.eq.s32.totalorder %s38, 3
      %p94 = por %p92, %p93
      %p95 = scmp.ne.s32.totalorder %s84, %s85
      %p96 = scmp.eq.s32.totalorder %s38, 0
      %p97 = por %p95, %p96
      %p98 = scmp.ne.s32.totalorder %s84, %s85
      %p99 = scmp.eq.s32.totalorder %s39, 3
      %p100 = por %p98, %p99
      %p102 = scmp.ne.s32.totalorder %s85, %s101
      %p103 = scmp.eq.s32.totalorder %s39, 0
      %p104 = por %p102, %p103
      %s105 = ssub.s32 %s41, %s48
      %p106 = scmp.eq.s32.totalorder %s105, 0
      %s108 = sadd.s32 %s107, 1
      %s109 = scalar_select %p106, %s107, %s108
      %p112 = pneg %p106
      %p113 = scmp.eq.s32.totalorder %s33, 3
      %p114 = por %p112, %p113
      %p115 = scmp.ne.s32.totalorder %s107, %s110
      %p116 = scmp.eq.s32.totalorder %s33, 0
      %p117 = por %p115, %p116
      %p118 = scmp.ne.s32.totalorder %s107, %s110
      %p119 = scmp.eq.s32.totalorder %s38, 3
      %p120 = por %p118, %p119
      %p121 = scmp.ne.s32.totalorder %s110, %s111
      %p122 = scmp.eq.s32.totalorder %s38, 0
      %p123 = por %p121, %p122
      %p124 = scmp.ne.s32.totalorder %s110, %s111
      %p125 = scmp.eq.s32.totalorder %s39, 3
      %p126 = por %p124, %p125
      %p128 = scmp.ne.s32.totalorder %s111, %s127
      %p129 = scmp.eq.s32.totalorder %s39, 0
      %p130 = por %p128, %p129
      %s131 = ssub.s32 %s41, %s48
      %p132 = scmp.eq.s32.totalorder %s131, 0
      %s134 = sadd.s32 %s133, 1
      %s135 = scalar_select %p132, %s133, %s134
      %p138 = pneg %p132
      %p139 = scmp.eq.s32.totalorder %s33, 3
      %p140 = por %p138, %p139
      %p141 = scmp.ne.s32.totalorder %s133, %s136
      %p142 = scmp.eq.s32.totalorder %s33, 0
      %p143 = por %p141, %p142
      %p144 = scmp.ne.s32.totalorder %s133, %s136
      %p145 = scmp.eq.s32.totalorder %s38, 3
      %p146 = por %p144, %p145
      %p147 = scmp.ne.s32.totalorder %s136, %s137
      %p148 = scmp.eq.s32.totalorder %s38, 0
      %p149 = por %p147, %p148
      %p150 = scmp.ne.s32.totalorder %s136, %s137
      %p151 = scmp.eq.s32.totalorder %s39, 3
      %p152 = por %p150, %p151
      %p154 = scmp.ne.s32.totalorder %s137, %s153
      %p155 = scmp.eq.s32.totalorder %s39, 0
      %p156 = por %p154, %p155
      %s157 = ssub.s32 %s41, %s48
      %p158 = scmp.eq.s32.totalorder %s157, 0
      %s160 = sadd.s32 %s159, 1
      %s161 = scalar_select %p158, %s159, %s160
      %p164 = pneg %p158
      %p165 = scmp.eq.s32.totalorder %s33, 3
      %p166 = por %p164, %p165
      %p167 = scmp.ne.s32.totalorder %s159, %s162
      %p168 = scmp.eq.s32.totalorder %s33, 0
      %p169 = por %p167, %p168
      %p170 = scmp.ne.s32.totalorder %s159, %s162
      %p171 = scmp.eq.s32.totalorder %s38, 3
      %p172 = por %p170, %p171
      %p173 = scmp.ne.s32.totalorder %s162, %s163
      %p174 = scmp.eq.s32.totalorder %s38, 0
      %p175 = por %p173, %p174
      %p176 = scmp.ne.s32.totalorder %s162, %s163
      %p177 = scmp.eq.s32.totalorder %s39, 3
      %p178 = por %p176, %p177
      %p180 = scmp.ne.s32.totalorder %s163, %s179
      %p181 = scmp.eq.s32.totalorder %s39, 0
      %p182 = por %p180, %p181
      %s183 = ssub.s32 %s41, %s48
      %p184 = scmp.eq.s32.totalorder %s183, 0
      %s186 = sadd.s32 %s185, 1
      %s187 = scalar_select %p184, %s185, %s186
      %p190 = pneg %p184
      %p191 = scmp.eq.s32.totalorder %s33, 3
      %p192 = por %p190, %p191
      %p193 = scmp.ne.s32.totalorder %s185, %s188
      %p194 = scmp.eq.s32.totalorder %s33, 0
      %p195 = por %p193, %p194
      %p196 = scmp.ne.s32.totalorder %s185, %s188
      %p197 = scmp.eq.s32.totalorder %s38, 3
      %p198 = por %p196, %p197
      %p199 = scmp.ne.s32.totalorder %s188, %s189
      %p200 = scmp.eq.s32.totalorder %s38, 0
      %p201 = por %p199, %p200
      %p202 = scmp.ne.s32.totalorder %s188, %s189
      %p203 = scmp.eq.s32.totalorder %s39, 3
      %p204 = por %p202, %p203
      %p206 = scmp.ne.s32.totalorder %s189, %s205
      %p207 = scmp.eq.s32.totalorder %s39, 0
      %p208 = por %p206, %p207
      %s209 = ssub.s32 %s41, %s48
      %p210 = scmp.eq.s32.totalorder %s209, 0
      %s212 = sadd.s32 %s211, 1
      %s213 = scalar_select %p210, %s211, %s212
      %p216 = pneg %p210
      %p217 = scmp.eq.s32.totalorder %s33, 3
      %p218 = por %p216, %p217
      %p219 = scmp.ne.s32.totalorder %s211, %s214
      %p220 = scmp.eq.s32.totalorder %s33, 0
      %p221 = por %p219, %p220
      %p222 = scmp.ne.s32.totalorder %s211, %s214
      %p223 = scmp.eq.s32.totalorder %s38, 3
      %p224 = por %p222, %p223
      %p225 = scmp.ne.s32.totalorder %s214, %s215
      %p226 = scmp.eq.s32.totalorder %s38, 0
      %p227 = por %p225, %p226
      %p228 = scmp.ne.s32.totalorder %s214, %s215
      %p229 = scmp.eq.s32.totalorder %s39, 3
      %p230 = por %p228, %p229
      %p232 = scmp.ne.s32.totalorder %s215, %s231
      %p233 = scmp.eq.s32.totalorder %s39, 0
      %p234 = por %p232, %p233
      %s236 = sadd.s32 %s235, 1
      %p239 = scmp.eq.s32.totalorder %s33, 3
      %p240 = scmp.ne.s32.totalorder %s235, %s237
      %p241 = scmp.eq.s32.totalorder %s33, 0
      %p242 = por %p240, %p241
      %p243 = scmp.ne.s32.totalorder %s235, %s237
      %p244 = scmp.eq.s32.totalorder %s38, 3
      %p245 = por %p243, %p244
      %p246 = scmp.ne.s32.totalorder %s237, %s238
      %p247 = scmp.eq.s32.totalorder %s38, 0
      %p248 = por %p246, %p247
      %p249 = scmp.ne.s32.totalorder %s237, %s238
      %p250 = scmp.eq.s32.totalorder %s39, 3
      %p251 = por %p249, %p250
      %p253 = scmp.ne.s32.totalorder %s238, %s252
      %p254 = scmp.eq.s32.totalorder %s39, 0
      %p255 = por %p253, %p254
      %s257 = sadd.s32 %s256, 1
      %p260 = scmp.eq.s32.totalorder %s33, 3
      %p261 = scmp.ne.s32.totalorder %s256, %s258
      %p262 = scmp.eq.s32.totalorder %s33, 0
      %p263 = por %p261, %p262
      %p264 = scmp.ne.s32.totalorder %s256, %s258
      %p265 = scmp.eq.s32.totalorder %s38, 3
      %p266 = por %p264, %p265
      %p267 = scmp.ne.s32.totalorder %s258, %s259
      %p268 = scmp.eq.s32.totalorder %s38, 0
      %p269 = por %p267, %p268
      %p270 = scmp.ne.s32.totalorder %s258, %s259
      %p271 = scmp.eq.s32.totalorder %s39, 3
      %p272 = por %p270, %p271
      %p274 = scmp.ne.s32.totalorder %s259, %s273
      %p275 = scmp.eq.s32.totalorder %s39, 0
      %p276 = por %p274, %p275
      %s278 = sadd.s32 %s277, 1
      %p281 = scmp.eq.s32.totalorder %s33, 3
      %p282 = scmp.ne.s32.totalorder %s277, %s279
      %p283 = scmp.eq.s32.totalorder %s33, 0
      %p284 = por %p282, %p283
      %p285 = scmp.ne.s32.totalorder %s277, %s279
      %p286 = scmp.eq.s32.totalorder %s38, 3
      %p287 = por %p285, %p286
      %p288 = scmp.ne.s32.totalorder %s279, %s280
      %p289 = scmp.eq.s32.totalorder %s38, 0
      %p290 = por %p288, %p289
      %p291 = scmp.ne.s32.totalorder %s279, %s280
      %p292 = scmp.eq.s32.totalorder %s39, 3
      %p293 = por %p291, %p292
      %p295 = scmp.ne.s32.totalorder %s280, %s294
      %p296 = scmp.eq.s32.totalorder %s39, 0
      %p297 = por %p295, %p296
      %s298 = ssub.s32 %s40, %s52
      %p299 = scmp.eq.s32.totalorder %s298, 0
      %s301 = sadd.s32 %s300, 1
      %s302 = scalar_select %p299, %s300, %s301
      %p305 = pneg %p299
      %p306 = scmp.eq.s32.totalorder %s33, 3
      %p307 = por %p305, %p306
      %p308 = scmp.ne.s32.totalorder %s300, %s303
      %p309 = scmp.eq.s32.totalorder %s33, 0
      %p310 = por %p308, %p309
      %p311 = scmp.ne.s32.totalorder %s300, %s303
      %p312 = scmp.eq.s32.totalorder %s38, 3
      %p313 = por %p311, %p312
      %p314 = scmp.ne.s32.totalorder %s303, %s304
      %p315 = scmp.eq.s32.totalorder %s38, 0
      %p316 = por %p314, %p315
      %p317 = scmp.ne.s32.totalorder %s303, %s304
      %p318 = scmp.eq.s32.totalorder %s39, 3
      %p319 = por %p317, %p318
      %p321 = scmp.ne.s32.totalorder %s304, %s320
      %p322 = scmp.eq.s32.totalorder %s39, 0
      %p323 = por %p321, %p322
      %p324 = scmp.le.s32.totalorder 1, %s33
      %p325 = scmp.lt.s32.totalorder %s33, 5
      %p326 = pnand %p324, %p325
      %p327 = pneg %p326
      // Predicated region
      $region9: #{bert_classification_forward.1} parent=5 // pred_check
        _
      $region10: #{bert_classification_forward.1} parent=5 // pred_check_branch
        %329 = sbr.rel (%p326) target = $region12
      $region11: #{bert_classification_forward.1} parent=5 // pred_region
        %s330 = ssub.s32 %s33, 1
        // Predicated region
        $region13: #{bert_classification_forward.1} parent=11 // pred_check
          %p331 = pneg %p248
        $region14: #{bert_classification_forward.1} parent=11 // pred_check_branch
          %333 = sbr.rel (%p331) target = $region16
        $region15: #{bert_classification_forward.1} parent=11 // pred_region
          %s335 = ssub.s32 256, 256
          %336 = vsyncadd [#allocation17], %s335
          %s337 = sshll.u32 [#allocation16], 4
          %s338 = int_to_ptr.vmem [resolvable:$true] %s337
          %343 = dma.hbm_to_vmem [thread:$0]  %s7, 256, %s338, [#allocation17], 64, 64, 4
        $region16: #{bert_classification_forward.1} parent=11 // pred_fallthru
          _
        // Predicated region
        $region17: #{bert_classification_forward.1} parent=11 // pred_check
          %p344 = pneg %p269
        $region18: #{bert_classification_forward.1} parent=11 // pred_check_branch
          %346 = sbr.rel (%p344) target = $region20
        $region19: #{bert_classification_forward.1} parent=11 // pred_region
          %s348 = ssub.s32 512, 512
          %349 = vsyncadd [#allocation17], %s348
          %s350 = sshll.u32 [#allocation18], 4
          %s351 = int_to_ptr.vmem [resolvable:$true] %s350
          %356 = dma.hbm_to_vmem [thread:$0]  %s8, 512, %s351, [#allocation17], 64, 64, 4
        $region20: #{bert_classification_forward.1} parent=11 // pred_fallthru
          _
        // Predicated region
        $region21: #{bert_classification_forward.1} parent=11 // pred_check
          %p357 = pneg %p290
        $region22: #{bert_classification_forward.1} parent=11 // pred_check_branch
          %359 = sbr.rel (%p357) target = $region24
        $region23: #{bert_classification_forward.1} parent=11 // pred_region
          %s361 = ssub.s32 128, 128
          %362 = vsyncadd [#allocation20], %s361
          %s364 = sshll.u32 [#allocation19], 4
          %s365 = int_to_ptr.vmem [resolvable:$true] %s364
          %367 = dma.hbm_to_vmem [thread:$0]  %s9, 128, %s365, [#allocation20]
        $region24: #{bert_classification_forward.1} parent=11 // pred_fallthru
          _
      $region12: #{bert_classification_forward.1} parent=5 // pred_fallthru
        _
      %p368 = scmp.lt.s32.totalorder %s33, 4
      // Predicated region
      $region25: #{bert_classification_forward.1} parent=5 // pred_check
        %p369 = pneg %p368
      $region26: #{bert_classification_forward.1} parent=5 // pred_check_branch
        %371 = sbr.rel (%p369) target = $region28
      $region27: #{bert_classification_forward.1} parent=5 // pred_region
        // Predicated region
        $region29: #{bert_classification_forward.1} parent=27 // pred_check
          %p372 = pneg %p65
        $region30: #{bert_classification_forward.1} parent=27 // pred_check_branch
          %374 = sbr.rel (%p372) target = $region32
        $region31: #{bert_classification_forward.1} parent=27 // pred_region
          %s375 = sand.u32 %s55, 1
          %s376 = scalar_lea.sflag [#allocation5], %s375
          %s377 = sand.u32 %s55, 1
          %s378 = smul.addr %s377, 8
          %s379 = scalar_lea.vmem [#allocation4], %s378
          %s381 = ssub.s32 128, 128
          %382 = vsyncadd %s376, %s381
          %s383 = smul.addr %s40, 128
          %s384 = scalar_lea.hbm %s0, %s383
          %s386 = sshll.u32 %s379, 4
          %s387 = int_to_ptr.vmem [resolvable:$true] %s386
          %389 = dma.hbm_to_vmem [thread:$0]  %s384, 128, %s387, %s376
        $region32: #{bert_classification_forward.1} parent=27 // pred_fallthru
          _
        // Predicated region
        $region33: #{bert_classification_forward.1} parent=27 // pred_check
          %p390 = pneg %p91
        $region34: #{bert_classification_forward.1} parent=27 // pred_check_branch
          %392 = sbr.rel (%p390) target = $region36
        $region35: #{bert_classification_forward.1} parent=27 // pred_region
          %s393 = sand.u32 %s33, 1
          %s394 = scalar_lea.sflag [#allocation8], %s393
          %s395 = sand.u32 %s81, 1
          %s396 = smul.addr %s395, 4
          %s397 = scalar_lea.vmem [#allocation7], %s396
          %s399 = ssub.s32 64, 64
          %400 = vsyncadd %s394, %s399
          %s401 = smul.addr %s40, 16
          %s402 = scalar_lea.hbm %s1, %s401
          %s403 = sshll.u32 %s397, 4
          %s404 = int_to_ptr.vmem [resolvable:$true] %s403
          %409 = dma.hbm_to_vmem [thread:$0]  %s402, 64, %s404, %s394, 32, 16, 1
        $region36: #{bert_classification_forward.1} parent=27 // pred_fallthru
          _
        // Predicated region
        $region37: #{bert_classification_forward.1} parent=27 // pred_check
          %p410 = pneg %p117
        $region38: #{bert_classification_forward.1} parent=27 // pred_check_branch
          %412 = sbr.rel (%p410) target = $region40
        $region39: #{bert_classification_forward.1} parent=27 // pred_region
          %s413 = sand.u32 %s33, 1
          %s414 = scalar_lea.sflag [#allocation8], %s413
          %s415 = sand.u32 %s107, 1
          %s416 = smul.addr %s415, 16
          %s417 = scalar_lea.vmem [#allocation9], %s416
          %s419 = ssub.s32 256, 256
          %420 = vsyncadd %s414, %s419
          %s421 = smul.addr %s41, 4
          %s422 = smul.addr %s421, 64
          %s423 = scalar_lea.hbm %s2, %s422
          %s424 = sshll.u32 %s417, 4
          %s425 = int_to_ptr.vmem [resolvable:$true] %s424
          %430 = dma.hbm_to_vmem [thread:$0]  %s423, 256, %s425, %s414, 64, 64, 4
        $region40: #{bert_classification_forward.1} parent=27 // pred_fallthru
          _
        // Predicated region
        $region41: #{bert_classification_forward.1} parent=27 // pred_check
          %p431 = pneg %p143
        $region42: #{bert_classification_forward.1} parent=27 // pred_check_branch
          %433 = sbr.rel (%p431) target = $region44
        $region43: #{bert_classification_forward.1} parent=27 // pred_region
          %s434 = sand.u32 %s33, 1
          %s435 = scalar_lea.sflag [#allocation11], %s434
          %s436 = sand.u32 %s133, 1
          %s437 = smul.addr %s436, 16
          %s438 = scalar_lea.vmem [#allocation10], %s437
          %s440 = ssub.s32 256, 256
          %441 = vsyncadd %s435, %s440
          %s442 = smul.addr %s41, 4
          %s443 = smul.addr %s442, 64
          %s444 = scalar_lea.hbm %s3, %s443
          %s445 = sshll.u32 %s438, 4
          %s446 = int_to_ptr.vmem [resolvable:$true] %s445
          %451 = dma.hbm_to_vmem [thread:$0]  %s444, 256, %s446, %s435, 64, 64, 4
        $region44: #{bert_classification_forward.1} parent=27 // pred_fallthru
          _
        // Predicated region
        $region45: #{bert_classification_forward.1} parent=27 // pred_check
          %p452 = pneg %p169
        $region46: #{bert_classification_forward.1} parent=27 // pred_check_branch
          %454 = sbr.rel (%p452) target = $region48
        $region47: #{bert_classification_forward.1} parent=27 // pred_region
          %s455 = sand.u32 %s33, 1
          %s456 = scalar_lea.sflag [#allocation11], %s455
          %s457 = sand.u32 %s159, 1
          %s458 = smul.addr %s457, 16
          %s459 = scalar_lea.vmem [#allocation12], %s458
          %s461 = ssub.s32 256, 256
          %462 = vsyncadd %s456, %s461
          %s463 = smul.addr %s41, 4
          %s464 = smul.addr %s463, 64
          %s465 = scalar_lea.hbm %s4, %s464
          %s466 = sshll.u32 %s459, 4
          %s467 = int_to_ptr.vmem [resolvable:$true] %s466
          %472 = dma.hbm_to_vmem [thread:$0]  %s465, 256, %s467, %s456, 64, 64, 4
        $region48: #{bert_classification_forward.1} parent=27 // pred_fallthru
          _
        // Predicated region
        $region49: #{bert_classification_forward.1} parent=27 // pred_check
          %p473 = pneg %p195
        $region50: #{bert_classification_forward.1} parent=27 // pred_check_branch
          %475 = sbr.rel (%p473) target = $region52
        $region51: #{bert_classification_forward.1} parent=27 // pred_region
          %s476 = sand.u32 %s33, 1
          %s477 = scalar_lea.sflag [#allocation14], %s476
          %s478 = sand.u32 %s185, 1
          %s479 = smul.addr %s478, 32
          %s480 = scalar_lea.vmem [#allocation13], %s479
          %s482 = ssub.s32 512, 512
          %483 = vsyncadd %s477, %s482
          %s484 = smul.addr %s41, 8
          %s485 = smul.addr %s484, 64
          %s486 = scalar_lea.hbm %s5, %s485
          %s487 = sshll.u32 %s480, 4
          %s488 = int_to_ptr.vmem [resolvable:$true] %s487
          %493 = dma.hbm_to_vmem [thread:$0]  %s486, 512, %s488, %s477, 64, 64, 4
        $region52: #{bert_classification_forward.1} parent=27 // pred_fallthru
          _
        // Predicated region
        $region53: #{bert_classification_forward.1} parent=27 // pred_check
          %p494 = pneg %p221
        $region54: #{bert_classification_forward.1} parent=27 // pred_check_branch
          %496 = sbr.rel (%p494) target = $region56
        $region55: #{bert_classification_forward.1} parent=27 // pred_region
          %s497 = sand.u32 %s33, 1
          %s498 = scalar_lea.sflag [#allocation14], %s497
          %s499 = sand.u32 %s211, 1
          %s500 = smul.addr %s499, 8
          %s501 = scalar_lea.vmem [#allocation15], %s500
          %s503 = ssub.s32 128, 128
          %504 = vsyncadd %s498, %s503
          %s505 = smul.addr %s41, 128
          %s506 = scalar_lea.hbm %s6, %s505
          %s508 = sshll.u32 %s501, 4
          %s509 = int_to_ptr.vmem [resolvable:$true] %s508
          %511 = dma.hbm_to_vmem [thread:$0]  %s506, 128, %s509, %s498
        $region56: #{bert_classification_forward.1} parent=27 // pred_fallthru
          _
      $region28: #{bert_classification_forward.1} parent=5 // pred_fallthru
        _
      %p512 = scmp.le.s32.totalorder 1, %s33
      %p513 = scmp.lt.s32.totalorder %s33, 5
      %p514 = pnand %p512, %p513
      %p515 = pneg %p514
      // Predicated region
      $region57: #{bert_classification_forward.1} parent=5 // pred_check
        _
      $region58: #{bert_classification_forward.1} parent=5 // pred_check_branch
        %517 = sbr.rel (%p514) target = $region60
      $region59: #{bert_classification_forward.1} parent=5 // pred_region
        %s518 = ssub.s32 %s33, 1
        %s519 = sand.u32 %s58, 1
        %s520 = scalar_lea.sflag [#allocation5], %s519
        %s521 = sand.u32 %s58, 1
        %s522 = smul.addr %s521, 8
        %s523 = scalar_lea.vmem [#allocation4], %s522
        // Predicated region
        $region61: #{bert_classification_forward.1} parent=59 // pred_check
          %p524 = pneg %p71
        $region62: #{bert_classification_forward.1} parent=59 // pred_check_branch
          %526 = sbr.rel (%p524) target = $region64
        $region63: #{bert_classification_forward.1} parent=59 // pred_region
          %527 = dma.done %s520, 128
        $region64: #{bert_classification_forward.1} parent=59 // pred_fallthru
          _
        %s528 = sand.u32 %s38, 1
        %s529 = scalar_lea.sflag [#allocation8], %s528
        %s530 = sand.u32 %s84, 1
        %s531 = smul.addr %s530, 4
        %s532 = scalar_lea.vmem [#allocation7], %s531
        // Predicated region
        $region65: #{bert_classification_forward.1} parent=59 // pred_check
          %p533 = pneg %p97
        $region66: #{bert_classification_forward.1} parent=59 // pred_check_branch
          %535 = sbr.rel (%p533) target = $region68
        $region67: #{bert_classification_forward.1} parent=59 // pred_region
          %536 = dma.done %s529, 64
        $region68: #{bert_classification_forward.1} parent=59 // pred_fallthru
          _
        %s537 = sand.u32 %s38, 1
        %s538 = scalar_lea.sflag [#allocation8], %s537
        %s539 = sand.u32 %s110, 1
        %s540 = smul.addr %s539, 16
        %s541 = scalar_lea.vmem [#allocation9], %s540
        // Predicated region
        $region69: #{bert_classification_forward.1} parent=59 // pred_check
          %p542 = pneg %p123
        $region70: #{bert_classification_forward.1} parent=59 // pred_check_branch
          %544 = sbr.rel (%p542) target = $region72
        $region71: #{bert_classification_forward.1} parent=59 // pred_region
          %545 = dma.done %s538, 256
        $region72: #{bert_classification_forward.1} parent=59 // pred_fallthru
          _
        %s546 = sand.u32 %s38, 1
        %s547 = scalar_lea.sflag [#allocation11], %s546
        %s548 = sand.u32 %s136, 1
        %s549 = smul.addr %s548, 16
        %s550 = scalar_lea.vmem [#allocation10], %s549
        // Predicated region
        $region73: #{bert_classification_forward.1} parent=59 // pred_check
          %p551 = pneg %p149
        $region74: #{bert_classification_forward.1} parent=59 // pred_check_branch
          %553 = sbr.rel (%p551) target = $region76
        $region75: #{bert_classification_forward.1} parent=59 // pred_region
          %554 = dma.done %s547, 256
        $region76: #{bert_classification_forward.1} parent=59 // pred_fallthru
          _
        %s555 = sand.u32 %s38, 1
        %s556 = scalar_lea.sflag [#allocation11], %s555
        %s557 = sand.u32 %s162, 1
        %s558 = smul.addr %s557, 16
        %s559 = scalar_lea.vmem [#allocation12], %s558
        // Predicated region
        $region77: #{bert_classification_forward.1} parent=59 // pred_check
          %p560 = pneg %p175
        $region78: #{bert_classification_forward.1} parent=59 // pred_check_branch
          %562 = sbr.rel (%p560) target = $region80
        $region79: #{bert_classification_forward.1} parent=59 // pred_region
          %563 = dma.done %s556, 256
        $region80: #{bert_classification_forward.1} parent=59 // pred_fallthru
          _
        %s564 = sand.u32 %s38, 1
        %s565 = scalar_lea.sflag [#allocation14], %s564
        %s566 = sand.u32 %s188, 1
        %s567 = smul.addr %s566, 32
        %s568 = scalar_lea.vmem [#allocation13], %s567
        // Predicated region
        $region81: #{bert_classification_forward.1} parent=59 // pred_check
          %p569 = pneg %p201
        $region82: #{bert_classification_forward.1} parent=59 // pred_check_branch
          %571 = sbr.rel (%p569) target = $region84
        $region83: #{bert_classification_forward.1} parent=59 // pred_region
          %572 = dma.done %s565, 512
        $region84: #{bert_classification_forward.1} parent=59 // pred_fallthru
          _
        %s573 = sand.u32 %s38, 1
        %s574 = scalar_lea.sflag [#allocation14], %s573
        %s575 = sand.u32 %s214, 1
        %s576 = smul.addr %s575, 8
        %s577 = scalar_lea.vmem [#allocation15], %s576
        // Predicated region
        $region85: #{bert_classification_forward.1} parent=59 // pred_check
          %p578 = pneg %p227
        $region86: #{bert_classification_forward.1} parent=59 // pred_check_branch
          %580 = sbr.rel (%p578) target = $region88
        $region87: #{bert_classification_forward.1} parent=59 // pred_region
          %581 = dma.done %s574, 128
        $region88: #{bert_classification_forward.1} parent=59 // pred_fallthru
          _
        // Predicated region
        $region89: #{bert_classification_forward.1} parent=59 // pred_check
          %p582 = pneg %p248
        $region90: #{bert_classification_forward.1} parent=59 // pred_check_branch
          %584 = sbr.rel (%p582) target = $region92
        $region91: #{bert_classification_forward.1} parent=59 // pred_region
          %585 = dma.done [#allocation17], 256
        $region92: #{bert_classification_forward.1} parent=59 // pred_fallthru
          _
        // Predicated region
        $region93: #{bert_classification_forward.1} parent=59 // pred_check
          %p586 = pneg %p269
        $region94: #{bert_classification_forward.1} parent=59 // pred_check_branch
          %588 = sbr.rel (%p586) target = $region96
        $region95: #{bert_classification_forward.1} parent=59 // pred_region
          %589 = dma.done [#allocation17], 512
        $region96: #{bert_classification_forward.1} parent=59 // pred_fallthru
          _
        // Predicated region
        $region97: #{bert_classification_forward.1} parent=59 // pred_check
          %p590 = pneg %p290
        $region98: #{bert_classification_forward.1} parent=59 // pred_check_branch
          %592 = sbr.rel (%p590) target = $region100
        $region99: #{bert_classification_forward.1} parent=59 // pred_region
          %593 = dma.done [#allocation20], 128
        $region100: #{bert_classification_forward.1} parent=59 // pred_fallthru
          _
        %s594 = sand.u32 %s58, 1
        %s595 = scalar_lea.sflag [#allocation5], %s594
        %s596 = sand.u32 %s58, 1
        %s597 = smul.addr %s596, 8
        %s598 = scalar_lea.vmem [#allocation4], %s597
        %p599 = pneg %p71
        %p600 = pneg %p68
        %s601 = sand.u32 %s38, 1
        %s602 = scalar_lea.sflag [#allocation8], %s601
        %s603 = sand.u32 %s84, 1
        %s604 = smul.addr %s603, 4
        %s605 = scalar_lea.vmem [#allocation7], %s604
        %p606 = pneg %p97
        %p607 = pneg %p94
        %s608 = sand.u32 %s38, 1
        %s609 = scalar_lea.sflag [#allocation8], %s608
        %s610 = sand.u32 %s110, 1
        %s611 = smul.addr %s610, 16
        %s612 = scalar_lea.vmem [#allocation9], %s611
        %p613 = pneg %p123
        %p614 = pneg %p120
        %s615 = sand.u32 %s38, 1
        %s616 = scalar_lea.sflag [#allocation11], %s615
        %s617 = sand.u32 %s136, 1
        %s618 = smul.addr %s617, 16
        %s619 = scalar_lea.vmem [#allocation10], %s618
        %p620 = pneg %p149
        %p621 = pneg %p146
        %s622 = sand.u32 %s38, 1
        %s623 = scalar_lea.sflag [#allocation11], %s622
        %s624 = sand.u32 %s162, 1
        %s625 = smul.addr %s624, 16
        %s626 = scalar_lea.vmem [#allocation12], %s625
        %p627 = pneg %p175
        %p628 = pneg %p172
        %s629 = sand.u32 %s38, 1
        %s630 = scalar_lea.sflag [#allocation14], %s629
        %s631 = sand.u32 %s188, 1
        %s632 = smul.addr %s631, 32
        %s633 = scalar_lea.vmem [#allocation13], %s632
        %p634 = pneg %p201
        %p635 = pneg %p198
        %s636 = sand.u32 %s38, 1
        %s637 = scalar_lea.sflag [#allocation14], %s636
        %s638 = sand.u32 %s214, 1
        %s639 = smul.addr %s638, 8
        %s640 = scalar_lea.vmem [#allocation15], %s639
        %p641 = pneg %p227
        %p642 = pneg %p224
        %p643 = pneg %p248
        %p644 = pneg %p245
        %p645 = pneg %p269
        %p646 = pneg %p266
        %p647 = pneg %p290
        %p648 = pneg %p287
        %p649 = pneg %p316
        %p650 = pneg %p313
        %s651 = sand.u32 %s303, 1
        %s652 = scalar_lea.sflag [#allocation6], %s651
        %s653 = sand.u32 %s303, 1
        %s654 = smul.addr %s653, 8
        %s655 = scalar_lea.vmem [#allocation21], %s654
        %p657 = scmp.eq.s32.totalorder %s43, 0
        // Predicated region
        $region101: #{bert_classification_forward.1} parent=59 // pred_check
          %p658 = pneg %p657
        $region102: #{bert_classification_forward.1} parent=59 // pred_check_branch
          %660 = sbr.rel (%p658) target = $region104
        $region103: #{bert_classification_forward.1} parent=59 // pred_region
          %v661 = vld [vmem:[%s523] sm:$0xff]
          %vm662 = vcmask 261120
          %663 = vst.msk [vmem:[#allocation2] sm:$0xff] %vm662, %v661
        $region104: #{bert_classification_forward.1} parent=59 // pred_fallthru
          _
        %v664 = vld [vmem:[#allocation2] sm:$0xff]
        %v665 = vld [vmem:[%s577] sm:$0xff]
        %v666 = vpack.c.bf16 %v664, %v664
        %v667 = vld [vmem:[%s541] sm:$0xf]
        %v668 = vld [vmem:[%s541 + $0x4] sm:$0xf]
        %v669 = vld [vmem:[%s541 + $0x8] sm:$0xf]
        %v670 = vld [vmem:[%s541 + $0xc] sm:$0xf]
        %v671 = vlaneseq
        %v672 = vshrl.u32 %v671, 7
        %v673 = vsub.s32 0, %v672
        %v674 = vrot.slane %v665, %v673
        %v679 = vunpack.c.l.b16 %v667
        %v680 = vunpack.c.l.b16 %v668
        %v681 = vunpack.c.l.b16 %v669
        %v682 = vunpack.c.l.b16 %v670
        %v683 = vpack.c.b16 %v680, %v679
        %v684 = vpack.c.b16 %v682, %v681
        %vm687 = vcmask 261120
        %v689 = vsel %vm687, %v666, 0
        %691 = vmatprep.subr.bf16.mxu0 0
        %692 = vmatpush1.bf16.msra.mxu0 %v683
        %693 = vmatprep.subr.bf16.mxu0 0
        %694 = vmatpush1.bf16.msra.mxu0 %v684
        %695 = vmatprep.subr.bf16.mxu0 0
        %696 = vmatpush1.bf16.msra.mxu0 0
        %697 = vmatprep.subr.bf16.mxu0 0
        %698 = vmatpush1.bf16.msra.mxu0 0
        %699 = vmatprep.subr.bf16.mxu0 0
        %700 = vmatpush1.bf16.msra.mxu0 0
        %701 = vmatprep.subr.bf16.mxu0 0
        %702 = vmatpush1.bf16.msra.mxu0 0
        %703 = vmatprep.subr.bf16.mxu0 0
        %704 = vmatpush1.bf16.msra.mxu0 0
        %705 = vmatprep.subr.bf16.mxu0 0
        %706 = vmatpush1.bf16.msra.mxu0 0
        %707 = vmatprep.subr.bf16.mxu0 0
        %708 = vmatpush1.bf16.msra.mxu0 0
        %709 = vmatprep.subr.bf16.mxu0 0
        %710 = vmatpush1.bf16.msra.mxu0 0
        %711 = vmatprep.subr.bf16.mxu0 0
        %712 = vmatpush1.bf16.msra.mxu0 0
        %713 = vmatprep.subr.bf16.mxu0 0
        %714 = vmatpush1.bf16.msra.mxu0 0
        %715 = vmatprep.subr.bf16.mxu0 0
        %716 = vmatpush1.bf16.msra.mxu0 0
        %717 = vmatprep.subr.bf16.mxu0 0
        %718 = vmatpush1.bf16.msra.mxu0 0
        %719 = vmatprep.subr.bf16.mxu0 0
        %720 = vmatpush1.bf16.msra.mxu0 0
        %721 = vmatprep.subr.bf16.mxu0 0
        %722 = vmatpush1.bf16.msra.mxu0 0
        %723 = vmatprep.mubr.bf16.mxu0 0
        %724 = vmatmul.mubr.bf16.gmra.mrb[0].mxu0 %v689
        %v725 = vpop.f32.mrb[0].mxu0
        %v726 = vadd.f32 %v674, %v725
        %v727 = vpop.f32.mrb[0].mxu0
        %v728 = vpop.f32.mrb[0].mxu0
        %v729 = vpop.f32.mrb[0].mxu0
        %730 = vdwg.mxu0
        %732 = vrot.lane.b32.xlu0 %v726, 120
        %v733 = vpop.permute.xlu0 %732
        %735 = vrot.lane.b32.xlu0 %v726, 112
        %v736 = vpop.permute.xlu0 %735
        %738 = vrot.lane.b32.xlu0 %v726, 104
        %v739 = vpop.permute.xlu0 %738
        %v741 = vld [vmem:[%s532] sm:$0x1]
        %v742 = vld [vmem:[%s532 + $0x1] sm:$0x1]
        %v743 = vld [vmem:[%s532 + $0x2] sm:$0x1]
        %v744 = vld [vmem:[%s532 + $0x3] sm:$0x1]
        %v749 = vlaneseq
        %v750 = vshrl.u32 %v749, 7
        %v751 = vsub.s32 0, %v750
        %v752 = vrot.slane %v741, %v751
        %v753 = vlaneseq
        %v754 = vshrl.u32 %v753, 7
        %v755 = vsub.s32 0, %v754
        %v756 = vrot.slane %v742, %v755
        %v757 = vlaneseq
        %v758 = vshrl.u32 %v757, 7
        %v759 = vsub.s32 0, %v758
        %v760 = vrot.slane %v743, %v759
        %v761 = vlaneseq
        %v762 = vshrl.u32 %v761, 7
        %v763 = vsub.s32 0, %v762
        %v764 = vrot.slane %v744, %v763
        %v769 = vpack.c.bf16 %v726, %v726
        %v770 = vpack.c.bf16 %v733, %v733
        %v771 = vpack.c.bf16 %v736, %v736
        %v772 = vpack.c.bf16 %v739, %v739
        %774 = vrot.lane.b32.xlu0 %v769, 96
        %v775 = vpop.permute.xlu0 %774
        %vm776 = vcmask 64512
        %v778 = vsel %vm776, %v769, 0
        %v781 = vsel %vm776, %v775, 0
        %783 = vmatprep.subr.bf16.mxu0 0
        %784 = vmatpush1.bf16.xpose.msra.mxu0 %v781
        %785 = vmatprep.subr.bf16.mxu0 0
        %786 = vmatpush1.bf16.xpose.msra.mxu0 0
        %787 = vmatprep.subr.bf16.mxu0 0
        %788 = vmatpush1.bf16.xpose.msra.mxu0 0
        %789 = vmatprep.subr.bf16.mxu0 0
        %790 = vmatpush1.bf16.xpose.msra.mxu0 0
        %791 = vmatprep.subr.bf16.mxu0 0
        %792 = vmatpush1.bf16.xpose.msra.mxu0 0
        %793 = vmatprep.subr.bf16.mxu0 0
        %794 = vmatpush1.bf16.xpose.msra.mxu0 0
        %795 = vmatprep.subr.bf16.mxu0 0
        %796 = vmatpush1.bf16.xpose.msra.mxu0 0
        %797 = vmatprep.subr.bf16.mxu0 0
        %798 = vmatpush1.bf16.xpose.msra.mxu0 0
        %799 = vmatprep.subr.bf16.mxu0 0
        %800 = vmatpush1.bf16.xpose.msra.mxu0 0
        %801 = vmatprep.subr.bf16.mxu0 0
        %802 = vmatpush1.bf16.xpose.msra.mxu0 0
        %803 = vmatprep.subr.bf16.mxu0 0
        %804 = vmatpush1.bf16.xpose.msra.mxu0 0
        %805 = vmatprep.subr.bf16.mxu0 0
        %806 = vmatpush1.bf16.xpose.msra.mxu0 0
        %807 = vmatprep.subr.bf16.mxu0 0
        %808 = vmatpush1.bf16.xpose.msra.mxu0 0
        %809 = vmatprep.subr.bf16.mxu0 0
        %810 = vmatpush1.bf16.xpose.msra.mxu0 0
        %811 = vmatprep.subr.bf16.mxu0 0
        %812 = vmatpush1.bf16.xpose.msra.mxu0 0
        %813 = vmatprep.subr.bf16.mxu0 0
        %814 = vmatpush1.bf16.xpose.msra.mxu0 0
        %815 = vmatprep.mubr.bf16.mxu0 0
        %816 = vmatmul.mubr.bf16.gmra.mrb[0].mxu0 %v778
        %v817 = vpop.f32.mrb[0].mxu0
        %v818 = vadd.f32 %v752, %v817
        %v819 = vpop.f32.mrb[0].mxu0
        %v820 = vpop.f32.mrb[0].mxu0
        %v821 = vpop.f32.mrb[0].mxu0
        %822 = vdwg.mxu0
        %824 = vrot.lane.b32.xlu0 %v770, 96
        %v825 = vpop.permute.xlu0 %824
        %v827 = vsel %vm776, %v770, 0
        %v830 = vsel %vm776, %v825, 0
        %832 = vmatprep.subr.bf16.mxu0 0
        %833 = vmatpush1.bf16.xpose.msra.mxu0 %v830
        %834 = vmatprep.subr.bf16.mxu0 0
        %835 = vmatpush1.bf16.xpose.msra.mxu0 0
        %836 = vmatprep.subr.bf16.mxu0 0
        %837 = vmatpush1.bf16.xpose.msra.mxu0 0
        %838 = vmatprep.subr.bf16.mxu0 0
        %839 = vmatpush1.bf16.xpose.msra.mxu0 0
        %840 = vmatprep.subr.bf16.mxu0 0
        %841 = vmatpush1.bf16.xpose.msra.mxu0 0
        %842 = vmatprep.subr.bf16.mxu0 0
        %843 = vmatpush1.bf16.xpose.msra.mxu0 0
        %844 = vmatprep.subr.bf16.mxu0 0
        %845 = vmatpush1.bf16.xpose.msra.mxu0 0
        %846 = vmatprep.subr.bf16.mxu0 0
        %847 = vmatpush1.bf16.xpose.msra.mxu0 0
        %848 = vmatprep.subr.bf16.mxu0 0
        %849 = vmatpush1.bf16.xpose.msra.mxu0 0
        %850 = vmatprep.subr.bf16.mxu0 0
        %851 = vmatpush1.bf16.xpose.msra.mxu0 0
        %852 = vmatprep.subr.bf16.mxu0 0
        %853 = vmatpush1.bf16.xpose.msra.mxu0 0
        %854 = vmatprep.subr.bf16.mxu0 0
        %855 = vmatpush1.bf16.xpose.msra.mxu0 0
        %856 = vmatprep.subr.bf16.mxu0 0
        %857 = vmatpush1.bf16.xpose.msra.mxu0 0
        %858 = vmatprep.subr.bf16.mxu0 0
        %859 = vmatpush1.bf16.xpose.msra.mxu0 0
        %860 = vmatprep.subr.bf16.mxu0 0
        %861 = vmatpush1.bf16.xpose.msra.mxu0 0
        %862 = vmatprep.subr.bf16.mxu0 0
        %863 = vmatpush1.bf16.xpose.msra.mxu0 0
        %864 = vmatprep.mubr.bf16.mxu0 0
        %865 = vmatmul.mubr.bf16.gmra.mrb[0].mxu0 %v827
        %v866 = vpop.f32.mrb[0].mxu0
        %v867 = vadd.f32 %v756, %v866
        %v868 = vpop.f32.mrb[0].mxu0
        %v869 = vpop.f32.mrb[0].mxu0
        %v870 = vpop.f32.mrb[0].mxu0
        %871 = vdwg.mxu0
        %873 = vrot.lane.b32.xlu0 %v771, 96
        %v874 = vpop.permute.xlu0 %873
        %v876 = vsel %vm776, %v771, 0
        %v879 = vsel %vm776, %v874, 0
        %881 = vmatprep.subr.bf16.mxu0 0
        %882 = vmatpush1.bf16.xpose.msra.mxu0 %v879
        %883 = vmatprep.subr.bf16.mxu0 0
        %884 = vmatpush1.bf16.xpose.msra.mxu0 0
        %885 = vmatprep.subr.bf16.mxu0 0
        %886 = vmatpush1.bf16.xpose.msra.mxu0 0
        %887 = vmatprep.subr.bf16.mxu0 0
        %888 = vmatpush1.bf16.xpose.msra.mxu0 0
        %889 = vmatprep.subr.bf16.mxu0 0
        %890 = vmatpush1.bf16.xpose.msra.mxu0 0
        %891 = vmatprep.subr.bf16.mxu0 0
        %892 = vmatpush1.bf16.xpose.msra.mxu0 0
        %893 = vmatprep.subr.bf16.mxu0 0
        %894 = vmatpush1.bf16.xpose.msra.mxu0 0
        %895 = vmatprep.subr.bf16.mxu0 0
        %896 = vmatpush1.bf16.xpose.msra.mxu0 0
        %897 = vmatprep.subr.bf16.mxu0 0
        %898 = vmatpush1.bf16.xpose.msra.mxu0 0
        %899 = vmatprep.subr.bf16.mxu0 0
        %900 = vmatpush1.bf16.xpose.msra.mxu0 0
        %901 = vmatprep.subr.bf16.mxu0 0
        %902 = vmatpush1.bf16.xpose.msra.mxu0 0
        %903 = vmatprep.subr.bf16.mxu0 0
        %904 = vmatpush1.bf16.xpose.msra.mxu0 0
        %905 = vmatprep.subr.bf16.mxu0 0
        %906 = vmatpush1.bf16.xpose.msra.mxu0 0
        %907 = vmatprep.subr.bf16.mxu0 0
        %908 = vmatpush1.bf16.xpose.msra.mxu0 0
        %909 = vmatprep.subr.bf16.mxu0 0
        %910 = vmatpush1.bf16.xpose.msra.mxu0 0
        %911 = vmatprep.subr.bf16.mxu0 0
        %912 = vmatpush1.bf16.xpose.msra.mxu0 0
        %913 = vmatprep.mubr.bf16.mxu0 0
        %914 = vmatmul.mubr.bf16.gmra.mrb[0].mxu0 %v876
        %v915 = vpop.f32.mrb[0].mxu0
        %v916 = vadd.f32 %v760, %v915
        %v917 = vpop.f32.mrb[0].mxu0
        %v918 = vpop.f32.mrb[0].mxu0
        %v919 = vpop.f32.mrb[0].mxu0
        %920 = vdwg.mxu0
        %922 = vrot.lane.b32.xlu0 %v772, 96
        %v923 = vpop.permute.xlu0 %922
        %v925 = vsel %vm776, %v772, 0
        %v928 = vsel %vm776, %v923, 0
        %930 = vmatprep.subr.bf16.mxu0 0
        %931 = vmatpush1.bf16.xpose.msra.mxu0 %v928
        %932 = vmatprep.subr.bf16.mxu0 0
        %933 = vmatpush1.bf16.xpose.msra.mxu0 0
        %934 = vmatprep.subr.bf16.mxu0 0
        %935 = vmatpush1.bf16.xpose.msra.mxu0 0
        %936 = vmatprep.subr.bf16.mxu0 0
        %937 = vmatpush1.bf16.xpose.msra.mxu0 0
        %938 = vmatprep.subr.bf16.mxu0 0
        %939 = vmatpush1.bf16.xpose.msra.mxu0 0
        %940 = vmatprep.subr.bf16.mxu0 0
        %941 = vmatpush1.bf16.xpose.msra.mxu0 0
        %942 = vmatprep.subr.bf16.mxu0 0
        %943 = vmatpush1.bf16.xpose.msra.mxu0 0
        %944 = vmatprep.subr.bf16.mxu0 0
        %945 = vmatpush1.bf16.xpose.msra.mxu0 0
        %946 = vmatprep.subr.bf16.mxu0 0
        %947 = vmatpush1.bf16.xpose.msra.mxu0 0
        %948 = vmatprep.subr.bf16.mxu0 0
        %949 = vmatpush1.bf16.xpose.msra.mxu0 0
        %950 = vmatprep.subr.bf16.mxu0 0
        %951 = vmatpush1.bf16.xpose.msra.mxu0 0
        %952 = vmatprep.subr.bf16.mxu0 0
        %953 = vmatpush1.bf16.xpose.msra.mxu0 0
        %954 = vmatprep.subr.bf16.mxu0 0
        %955 = vmatpush1.bf16.xpose.msra.mxu0 0
        %956 = vmatprep.subr.bf16.mxu0 0
        %957 = vmatpush1.bf16.xpose.msra.mxu0 0
        %958 = vmatprep.subr.bf16.mxu0 0
        %959 = vmatpush1.bf16.xpose.msra.mxu0 0
        %960 = vmatprep.subr.bf16.mxu0 0
        %961 = vmatpush1.bf16.xpose.msra.mxu0 0
        %962 = vmatprep.mubr.bf16.mxu0 0
        %963 = vmatmul.mubr.bf16.gmra.mrb[0].mxu0 %v925
        %v964 = vpop.f32.mrb[0].mxu0
        %v965 = vadd.f32 %v764, %v964
        %v966 = vpop.f32.mrb[0].mxu0
        %v967 = vpop.f32.mrb[0].mxu0
        %v968 = vpop.f32.mrb[0].mxu0
        %969 = vdwg.mxu0
        %v970 = vsel %vm776, %v818, -inf
        %971 = vmax.xlane.f32.xlu0 %v970
        %v972 = vpop.xlane.xlu0 %971
        %v973 = vsel %vm776, %v867, -inf
        %974 = vmax.xlane.f32.xlu0 %v973
        %v975 = vpop.xlane.xlu0 %974
        %v976 = vsel %vm776, %v916, -inf
        %977 = vmax.xlane.f32.xlu0 %v976
        %v978 = vpop.xlane.xlu0 %977
        %v979 = vsel %vm776, %v965, -inf
        %980 = vmax.xlane.f32.xlu0 %v979
        %v981 = vpop.xlane.xlu0 %980
        %v982 = vsub.f32 %v818, %v972
        %v983 = vsub.f32 %v867, %v975
        %v984 = vsub.f32 %v916, %v978
        %v985 = vsub.f32 %v965, %v981
        %v986 = vmul.f32 %v982, 1.442695
        %v987 = vpow.pop %v986
        %v988 = vmul.f32 %v983, 1.442695
        %v989 = vpow.pop %v988
        %v990 = vmul.f32 %v984, 1.442695
        %v991 = vpow.pop %v990
        %v992 = vmul.f32 %v985, 1.442695
        %v993 = vpow.pop %v992
        %v994 = vsel %vm776, %v987, 0.0
        %995 = vadd.xlane.f32.xlu0 %v994
        %v996 = vpop.xlane.xlu0 %995
        %v997 = vsel %vm776, %v989, 0.0
        %998 = vadd.xlane.f32.xlu0 %v997
        %v999 = vpop.xlane.xlu0 %998
        %v1000 = vsel %vm776, %v991, 0.0
        %1001 = vadd.xlane.f32.xlu0 %v1000
        %v1002 = vpop.xlane.xlu0 %1001
        %v1003 = vsel %vm776, %v993, 0.0
        %1004 = vadd.xlane.f32.xlu0 %v1003
        %v1005 = vpop.xlane.xlu0 %1004
        %v1006 = vrcp.pop %v996
        %v1007 = vrcp.pop %v999
        %v1008 = vrcp.pop %v1002
        %v1009 = vrcp.pop %v1005
        %v1010 = vmul.f32 %v987, %v1006
        %v1011 = vmul.f32 %v989, %v1007
        %v1012 = vmul.f32 %v991, %v1008
        %v1013 = vmul.f32 %v993, %v1009
        %v1014 = vpack.c.bf16 %v1010, %v1010
        %v1015 = vpack.c.bf16 %v1011, %v1011
        %v1016 = vpack.c.bf16 %v1012, %v1012
        %v1017 = vpack.c.bf16 %v1013, %v1013
        %1018 = vrot.lane.b32.xlu0 %v769, 64
        %v1019 = vpop.permute.xlu0 %1018
        %v1021 = vsel %vm776, %v1014, 0
        %vm1023 = vcmask 1043456
        %v1025 = vsel %vm1023, %v1019, 0
        %1027 = vmatprep.subr.bf16.mxu0 0
        %1028 = vmatpush1.bf16.msra.mxu0 %v1025
        %1029 = vmatprep.subr.bf16.mxu0 0
        %1030 = vmatpush1.bf16.msra.mxu0 0
        %1031 = vmatprep.subr.bf16.mxu0 0
        %1032 = vmatpush1.bf16.msra.mxu0 0
        %1033 = vmatprep.subr.bf16.mxu0 0
        %1034 = vmatpush1.bf16.msra.mxu0 0
        %1035 = vmatprep.subr.bf16.mxu0 0
        %1036 = vmatpush1.bf16.msra.mxu0 0
        %1037 = vmatprep.subr.bf16.mxu0 0
        %1038 = vmatpush1.bf16.msra.mxu0 0
        %1039 = vmatprep.subr.bf16.mxu0 0
        %1040 = vmatpush1.bf16.msra.mxu0 0
        %1041 = vmatprep.subr.bf16.mxu0 0
        %1042 = vmatpush1.bf16.msra.mxu0 0
        %1043 = vmatprep.subr.bf16.mxu0 0
        %1044 = vmatpush1.bf16.msra.mxu0 0
        %1045 = vmatprep.subr.bf16.mxu0 0
        %1046 = vmatpush1.bf16.msra.mxu0 0
        %1047 = vmatprep.subr.bf16.mxu0 0
        %1048 = vmatpush1.bf16.msra.mxu0 0
        %1049 = vmatprep.subr.bf16.mxu0 0
        %1050 = vmatpush1.bf16.msra.mxu0 0
        %1051 = vmatprep.subr.bf16.mxu0 0
        %1052 = vmatpush1.bf16.msra.mxu0 0
        %1053 = vmatprep.subr.bf16.mxu0 0
        %1054 = vmatpush1.bf16.msra.mxu0 0
        %1055 = vmatprep.subr.bf16.mxu0 0
        %1056 = vmatpush1.bf16.msra.mxu0 0
        %1057 = vmatprep.subr.bf16.mxu0 0
        %1058 = vmatpush1.bf16.msra.mxu0 0
        %1059 = vmatprep.mubr.bf16.mxu0 0
        %1060 = vmatmul.mubr.bf16.gmra.mrb[0].mxu0 %v1021
        %v1061 = vpop.f32.mrb[0].mxu0
        %v1062 = vadd.f32 0.0, %v1061
        %v1063 = vpop.f32.mrb[0].mxu0
        %v1064 = vpop.f32.mrb[0].mxu0
        %v1065 = vpop.f32.mrb[0].mxu0
        %1066 = vdwg.mxu0
        %1067 = vrot.lane.b32.xlu0 %v770, 64
        %v1068 = vpop.permute.xlu0 %1067
        %v1070 = vsel %vm776, %v1015, 0
        %v1073 = vsel %vm1023, %v1068, 0
        %1075 = vmatprep.subr.bf16.mxu0 0
        %1076 = vmatpush1.bf16.msra.mxu0 %v1073
        %1077 = vmatprep.subr.bf16.mxu0 0
        %1078 = vmatpush1.bf16.msra.mxu0 0
        %1079 = vmatprep.subr.bf16.mxu0 0
        %1080 = vmatpush1.bf16.msra.mxu0 0
        %1081 = vmatprep.subr.bf16.mxu0 0
        %1082 = vmatpush1.bf16.msra.mxu0 0
        %1083 = vmatprep.subr.bf16.mxu0 0
        %1084 = vmatpush1.bf16.msra.mxu0 0
        %1085 = vmatprep.subr.bf16.mxu0 0
        %1086 = vmatpush1.bf16.msra.mxu0 0
        %1087 = vmatprep.subr.bf16.mxu0 0
        %1088 = vmatpush1.bf16.msra.mxu0 0
        %1089 = vmatprep.subr.bf16.mxu0 0
        %1090 = vmatpush1.bf16.msra.mxu0 0
        %1091 = vmatprep.subr.bf16.mxu0 0
        %1092 = vmatpush1.bf16.msra.mxu0 0
        %1093 = vmatprep.subr.bf16.mxu0 0
        %1094 = vmatpush1.bf16.msra.mxu0 0
        %1095 = vmatprep.subr.bf16.mxu0 0
        %1096 = vmatpush1.bf16.msra.mxu0 0
        %1097 = vmatprep.subr.bf16.mxu0 0
        %1098 = vmatpush1.bf16.msra.mxu0 0
        %1099 = vmatprep.subr.bf16.mxu0 0
        %1100 = vmatpush1.bf16.msra.mxu0 0
        %1101 = vmatprep.subr.bf16.mxu0 0
        %1102 = vmatpush1.bf16.msra.mxu0 0
        %1103 = vmatprep.subr.bf16.mxu0 0
        %1104 = vmatpush1.bf16.msra.mxu0 0
        %1105 = vmatprep.subr.bf16.mxu0 0
        %1106 = vmatpush1.bf16.msra.mxu0 0
        %1107 = vmatprep.mubr.bf16.mxu0 0
        %1108 = vmatmul.mubr.bf16.gmra.mrb[0].mxu0 %v1070
        %v1109 = vpop.f32.mrb[0].mxu0
        %v1110 = vadd.f32 0.0, %v1109
        %v1111 = vpop.f32.mrb[0].mxu0
        %v1112 = vpop.f32.mrb[0].mxu0
        %v1113 = vpop.f32.mrb[0].mxu0
        %1114 = vdwg.mxu0
        %1115 = vrot.lane.b32.xlu0 %v771, 64
        %v1116 = vpop.permute.xlu0 %1115
        %v1118 = vsel %vm776, %v1016, 0
        %v1121 = vsel %vm1023, %v1116, 0
        %1123 = vmatprep.subr.bf16.mxu0 0
        %1124 = vmatpush1.bf16.msra.mxu0 %v1121
        %1125 = vmatprep.subr.bf16.mxu0 0
        %1126 = vmatpush1.bf16.msra.mxu0 0
        %1127 = vmatprep.subr.bf16.mxu0 0
        %1128 = vmatpush1.bf16.msra.mxu0 0
        %1129 = vmatprep.subr.bf16.mxu0 0
        %1130 = vmatpush1.bf16.msra.mxu0 0
        %1131 = vmatprep.subr.bf16.mxu0 0
        %1132 = vmatpush1.bf16.msra.mxu0 0
        %1133 = vmatprep.subr.bf16.mxu0 0
        %1134 = vmatpush1.bf16.msra.mxu0 0
        %1135 = vmatprep.subr.bf16.mxu0 0
        %1136 = vmatpush1.bf16.msra.mxu0 0
        %1137 = vmatprep.subr.bf16.mxu0 0
        %1138 = vmatpush1.bf16.msra.mxu0 0
        %1139 = vmatprep.subr.bf16.mxu0 0
        %1140 = vmatpush1.bf16.msra.mxu0 0
        %1141 = vmatprep.subr.bf16.mxu0 0
        %1142 = vmatpush1.bf16.msra.mxu0 0
        %1143 = vmatprep.subr.bf16.mxu0 0
        %1144 = vmatpush1.bf16.msra.mxu0 0
        %1145 = vmatprep.subr.bf16.mxu0 0
        %1146 = vmatpush1.bf16.msra.mxu0 0
        %1147 = vmatprep.subr.bf16.mxu0 0
        %1148 = vmatpush1.bf16.msra.mxu0 0
        %1149 = vmatprep.subr.bf16.mxu0 0
        %1150 = vmatpush1.bf16.msra.mxu0 0
        %1151 = vmatprep.subr.bf16.mxu0 0
        %1152 = vmatpush1.bf16.msra.mxu0 0
        %1153 = vmatprep.subr.bf16.mxu0 0
        %1154 = vmatpush1.bf16.msra.mxu0 0
        %1155 = vmatprep.mubr.bf16.mxu0 0
        %1156 = vmatmul.mubr.bf16.gmra.mrb[0].mxu0 %v1118
        %v1157 = vpop.f32.mrb[0].mxu0
        %v1158 = vadd.f32 0.0, %v1157
        %v1159 = vpop.f32.mrb[0].mxu0
        %v1160 = vpop.f32.mrb[0].mxu0
        %v1161 = vpop.f32.mrb[0].mxu0
        %1162 = vdwg.mxu0
        %1163 = vrot.lane.b32.xlu0 %v772, 64
        %v1164 = vpop.permute.xlu0 %1163
        %v1166 = vsel %vm776, %v1017, 0
        %v1169 = vsel %vm1023, %v1164, 0
        %1171 = vmatprep.subr.bf16.mxu0 0
        %1172 = vmatpush1.bf16.msra.mxu0 %v1169
        %1173 = vmatprep.subr.bf16.mxu0 0
        %1174 = vmatpush1.bf16.msra.mxu0 0
        %1175 = vmatprep.subr.bf16.mxu0 0
        %1176 = vmatpush1.bf16.msra.mxu0 0
        %1177 = vmatprep.subr.bf16.mxu0 0
        %1178 = vmatpush1.bf16.msra.mxu0 0
        %1179 = vmatprep.subr.bf16.mxu0 0
        %1180 = vmatpush1.bf16.msra.mxu0 0
        %1181 = vmatprep.subr.bf16.mxu0 0
        %1182 = vmatpush1.bf16.msra.mxu0 0
        %1183 = vmatprep.subr.bf16.mxu0 0
        %1184 = vmatpush1.bf16.msra.mxu0 0
        %1185 = vmatprep.subr.bf16.mxu0 0
        %1186 = vmatpush1.bf16.msra.mxu0 0
        %1187 = vmatprep.subr.bf16.mxu0 0
        %1188 = vmatpush1.bf16.msra.mxu0 0
        %1189 = vmatprep.subr.bf16.mxu0 0
        %1190 = vmatpush1.bf16.msra.mxu0 0
        %1191 = vmatprep.subr.bf16.mxu0 0
        %1192 = vmatpush1.bf16.msra.mxu0 0
        %1193 = vmatprep.subr.bf16.mxu0 0
        %1194 = vmatpush1.bf16.msra.mxu0 0
        %1195 = vmatprep.subr.bf16.mxu0 0
        %1196 = vmatpush1.bf16.msra.mxu0 0
        %1197 = vmatprep.subr.bf16.mxu0 0
        %1198 = vmatpush1.bf16.msra.mxu0 0
        %1199 = vmatprep.subr.bf16.mxu0 0
        %1200 = vmatpush1.bf16.msra.mxu0 0
        %1201 = vmatprep.subr.bf16.mxu0 0
        %1202 = vmatpush1.bf16.msra.mxu0 0
        %1203 = vmatprep.mubr.bf16.mxu0 0
        %1204 = vmatmul.mubr.bf16.gmra.mrb[0].mxu0 %v1166
        %v1205 = vpop.f32.mrb[0].mxu0
        %v1206 = vadd.f32 0.0, %v1205
        %v1207 = vpop.f32.mrb[0].mxu0
        %v1208 = vpop.f32.mrb[0].mxu0
        %v1209 = vpop.f32.mrb[0].mxu0
        %1210 = vdwg.mxu0
        %1211 = vst.msk [vmem:[#allocation3] sm:$0xff] %vm776, %v1062
        %1213 = vrot.lane.b32.xlu0 %v1110, 8
        %v1214 = vpop.permute.xlu0 %1213
        %vm1216 = vcmask 130112
        %1217 = vst.msk [vmem:[#allocation3] sm:$0xff] %vm1216, %v1214
        %1219 = vrot.lane.b32.xlu0 %v1158, 16
        %v1220 = vpop.permute.xlu0 %1219
        %vm1222 = vcmask 195712
        %1223 = vst.msk [vmem:[#allocation3] sm:$0xff] %vm1222, %v1220
        %1225 = vrot.lane.b32.xlu0 %v1206, 24
        %v1226 = vpop.permute.xlu0 %1225
        %vm1228 = vcmask 261312
        %1229 = vst.msk [vmem:[#allocation3] sm:$0xff] %vm1228, %v1226
        %v1230 = vld [vmem:[#allocation3] sm:$0xff]
        %v1231 = vpack.c.bf16 %v1230, %v1230
        %v1232 = vld [vmem:[%s550] sm:$0xf]
        %v1233 = vld [vmem:[%s550 + $0x4] sm:$0xf]
        %v1234 = vld [vmem:[%s550 + $0x8] sm:$0xf]
        %v1235 = vld [vmem:[%s550 + $0xc] sm:$0xf]
        %v1236 = vlaneseq
        %v1237 = vshrl.u32 %v1236, 7
        %v1238 = vsub.s32 1, %v1237
        %v1239 = vrot.slane %v665, %v1238
        %v1244 = vunpack.c.l.b16 %v1232
        %v1245 = vunpack.c.l.b16 %v1233
        %v1246 = vunpack.c.l.b16 %v1234
        %v1247 = vunpack.c.l.b16 %v1235
        %v1248 = vpack.c.b16 %v1245, %v1244
        %v1249 = vpack.c.b16 %v1247, %v1246
        %v1253 = vsel %vm687, %v1231, 0
        %1255 = vmatprep.subr.bf16.mxu0 0
        %1256 = vmatpush1.bf16.msra.mxu0 %v1248
        %1257 = vmatprep.subr.bf16.mxu0 0
        %1258 = vmatpush1.bf16.msra.mxu0 %v1249
        %1259 = vmatprep.subr.bf16.mxu0 0
        %1260 = vmatpush1.bf16.msra.mxu0 0
        %1261 = vmatprep.subr.bf16.mxu0 0
        %1262 = vmatpush1.bf16.msra.mxu0 0
        %1263 = vmatprep.subr.bf16.mxu0 0
        %1264 = vmatpush1.bf16.msra.mxu0 0
        %1265 = vmatprep.subr.bf16.mxu0 0
        %1266 = vmatpush1.bf16.msra.mxu0 0
        %1267 = vmatprep.subr.bf16.mxu0 0
        %1268 = vmatpush1.bf16.msra.mxu0 0
        %1269 = vmatprep.subr.bf16.mxu0 0
        %1270 = vmatpush1.bf16.msra.mxu0 0
        %1271 = vmatprep.subr.bf16.mxu0 0
        %1272 = vmatpush1.bf16.msra.mxu0 0
        %1273 = vmatprep.subr.bf16.mxu0 0
        %1274 = vmatpush1.bf16.msra.mxu0 0
        %1275 = vmatprep.subr.bf16.mxu0 0
        %1276 = vmatpush1.bf16.msra.mxu0 0
        %1277 = vmatprep.subr.bf16.mxu0 0
        %1278 = vmatpush1.bf16.msra.mxu0 0
        %1279 = vmatprep.subr.bf16.mxu0 0
        %1280 = vmatpush1.bf16.msra.mxu0 0
        %1281 = vmatprep.subr.bf16.mxu0 0
        %1282 = vmatpush1.bf16.msra.mxu0 0
        %1283 = vmatprep.subr.bf16.mxu0 0
        %1284 = vmatpush1.bf16.msra.mxu0 0
        %1285 = vmatprep.subr.bf16.mxu0 0
        %1286 = vmatpush1.bf16.msra.mxu0 0
        %1287 = vmatprep.mubr.bf16.mxu0 0
        %1288 = vmatmul.mubr.bf16.gmra.mrb[0].mxu0 %v1253
        %v1289 = vpop.f32.mrb[0].mxu0
        %v1290 = vadd.f32 %v1239, %v1289
        %v1291 = vpop.f32.mrb[0].mxu0
        %v1292 = vpop.f32.mrb[0].mxu0
        %v1293 = vpop.f32.mrb[0].mxu0
        %1294 = vdwg.mxu0
        %v1295 = vadd.f32 %v664, %v1290
        %v1296 = vsel %vm687, %v1295, 0.0
        %1297 = vadd.xlane.f32.xlu0 %v1296
        %v1298 = vpop.xlane.xlu0 %1297
        %v1299 = vrcp.pop 32.0
        %v1300 = vmul.f32 %v1298, %v1299
        %v1301 = vsub.f32 %v1295, %v1300
        %v1302 = vmul.f32 %v1301, %v1301
        %v1303 = vsel %vm687, %v1302, 0.0
        %1304 = vadd.xlane.f32.xlu0 %v1303
        %v1305 = vpop.xlane.xlu0 %1304
        %v1306 = vmul.f32 %v1305, %v1299
        %v1307 = vadd.f32 %v1306, 1e-12
        %v1308 = vrsqrt.pop %v1307
        %v1309 = vmul.f32 %v1301, %v1308
        %v1310 = vlaneseq
        %v1311 = vshrl.u32 %v1310, 7
        %v1312 = vsub.s32 2, %v1311
        %v1313 = vrot.slane %v665, %v1312
        %v1314 = vmul.f32 %v1309, %v1313
        %v1315 = vlaneseq
        %v1316 = vshrl.u32 %v1315, 7
        %v1317 = vsub.s32 3, %v1316
        %v1318 = vrot.slane %v665, %v1317
        %v1319 = vadd.f32 %v1314, %v1318
        %v1320 = vpack.c.bf16 %v1319, %v1319
        %v1321 = vld [vmem:[%s559] sm:$0xf]
        %v1322 = vld [vmem:[%s559 + $0x4] sm:$0xf]
        %v1323 = vld [vmem:[%s559 + $0x8] sm:$0xf]
        %v1324 = vld [vmem:[%s559 + $0xc] sm:$0xf]
        %v1325 = vlaneseq
        %v1326 = vshrl.u32 %v1325, 7
        %v1327 = vsub.s32 4, %v1326
        %v1328 = vrot.slane %v665, %v1327
        %v1333 = vunpack.c.l.b16 %v1321
        %v1334 = vunpack.c.l.b16 %v1322
        %v1335 = vunpack.c.l.b16 %v1323
        %v1336 = vunpack.c.l.b16 %v1324
        %v1337 = vpack.c.b16 %v1334, %v1333
        %v1338 = vpack.c.b16 %v1336, %v1335
        %v1342 = vsel %vm687, %v1320, 0
        %1344 = vmatprep.subr.bf16.mxu0 0
        %1345 = vmatpush1.bf16.msra.mxu0 %v1337
        %1346 = vmatprep.subr.bf16.mxu0 0
        %1347 = vmatpush1.bf16.msra.mxu0 %v1338
        %1348 = vmatprep.subr.bf16.mxu0 0
        %1349 = vmatpush1.bf16.msra.mxu0 0
        %1350 = vmatprep.subr.bf16.mxu0 0
        %1351 = vmatpush1.bf16.msra.mxu0 0
        %1352 = vmatprep.subr.bf16.mxu0 0
        %1353 = vmatpush1.bf16.msra.mxu0 0
        %1354 = vmatprep.subr.bf16.mxu0 0
        %1355 = vmatpush1.bf16.msra.mxu0 0
        %1356 = vmatprep.subr.bf16.mxu0 0
        %1357 = vmatpush1.bf16.msra.mxu0 0
        %1358 = vmatprep.subr.bf16.mxu0 0
        %1359 = vmatpush1.bf16.msra.mxu0 0
        %1360 = vmatprep.subr.bf16.mxu0 0
        %1361 = vmatpush1.bf16.msra.mxu0 0
        %1362 = vmatprep.subr.bf16.mxu0 0
        %1363 = vmatpush1.bf16.msra.mxu0 0
        %1364 = vmatprep.subr.bf16.mxu0 0
        %1365 = vmatpush1.bf16.msra.mxu0 0
        %1366 = vmatprep.subr.bf16.mxu0 0
        %1367 = vmatpush1.bf16.msra.mxu0 0
        %1368 = vmatprep.subr.bf16.mxu0 0
        %1369 = vmatpush1.bf16.msra.mxu0 0
        %1370 = vmatprep.subr.bf16.mxu0 0
        %1371 = vmatpush1.bf16.msra.mxu0 0
        %1372 = vmatprep.subr.bf16.mxu0 0
        %1373 = vmatpush1.bf16.msra.mxu0 0
        %1374 = vmatprep.subr.bf16.mxu0 0
        %1375 = vmatpush1.bf16.msra.mxu0 0
        %1376 = vmatprep.mubr.bf16.mxu0 0
        %1377 = vmatmul.mubr.bf16.gmra.mrb[0].mxu0 %v1342
        %v1378 = vpop.f32.mrb[0].mxu0
        %v1379 = vadd.f32 %v1328, %v1378
        %v1380 = vpop.f32.mrb[0].mxu0
        %v1381 = vpop.f32.mrb[0].mxu0
        %v1382 = vpop.f32.mrb[0].mxu0
        %1383 = vdwg.mxu0
        %v1384 = vmul.f32 %v1379, %v1379
        %v1385 = vmul.f32 %v1379, %v1384
        %v1386 = vmul.f32 %v1385, 0.044715
        %v1387 = vadd.f32 %v1379, %v1386
        %v1388 = vmul.f32 %v1387, 0.7978846
        %v1389 = vtanh.pop %v1388
        %v1390 = vadd.f32 %v1389, 1.0
        %v1391 = vmul.f32 %v1390, 0.5
        %v1392 = vmul.f32 %v1379, %v1391
        %v1393 = vpack.c.bf16 %v1392, %v1392
        %v1394 = vld [vmem:[%s568] sm:$0xf]
        %v1395 = vld [vmem:[%s568 + $0x4] sm:$0xf]
        %v1396 = vld [vmem:[%s568 + $0x8] sm:$0xf]
        %v1397 = vld [vmem:[%s568 + $0xc] sm:$0xf]
        %v1398 = vld [vmem:[%s568 + $0x10] sm:$0xf]
        %v1399 = vld [vmem:[%s568 + $0x14] sm:$0xf]
        %v1400 = vld [vmem:[%s568 + $0x18] sm:$0xf]
        %v1401 = vld [vmem:[%s568 + $0x1c] sm:$0xf]
        %v1402 = vlaneseq
        %v1403 = vshrl.u32 %v1402, 7
        %v1404 = vsub.s32 5, %v1403
        %v1405 = vrot.slane %v665, %v1404
        %v1414 = vunpack.c.l.b16 %v1394
        %v1415 = vunpack.c.l.b16 %v1395
        %v1416 = vunpack.c.l.b16 %v1396
        %v1417 = vunpack.c.l.b16 %v1397
        %v1418 = vunpack.c.l.b16 %v1398
        %v1419 = vunpack.c.l.b16 %v1399
        %v1420 = vunpack.c.l.b16 %v1400
        %v1421 = vunpack.c.l.b16 %v1401
        %v1422 = vpack.c.b16 %v1415, %v1414
        %v1423 = vpack.c.b16 %v1417, %v1416
        %v1424 = vpack.c.b16 %v1419, %v1418
        %v1425 = vpack.c.b16 %v1421, %v1420
        %vm1430 = vcmask 523264
        %v1432 = vsel %vm1430, %v1393, 0
        %1434 = vmatprep.subr.bf16.mxu0 0
        %1435 = vmatpush1.bf16.msra.mxu0 %v1422
        %1436 = vmatprep.subr.bf16.mxu0 0
        %1437 = vmatpush1.bf16.msra.mxu0 %v1423
        %1438 = vmatprep.subr.bf16.mxu0 0
        %1439 = vmatpush1.bf16.msra.mxu0 %v1424
        %1440 = vmatprep.subr.bf16.mxu0 0
        %1441 = vmatpush1.bf16.msra.mxu0 %v1425
        %1442 = vmatprep.subr.bf16.mxu0 0
        %1443 = vmatpush1.bf16.msra.mxu0 0
        %1444 = vmatprep.subr.bf16.mxu0 0
        %1445 = vmatpush1.bf16.msra.mxu0 0
        %1446 = vmatprep.subr.bf16.mxu0 0
        %1447 = vmatpush1.bf16.msra.mxu0 0
        %1448 = vmatprep.subr.bf16.mxu0 0
        %1449 = vmatpush1.bf16.msra.mxu0 0
        %1450 = vmatprep.subr.bf16.mxu0 0
        %1451 = vmatpush1.bf16.msra.mxu0 0
        %1452 = vmatprep.subr.bf16.mxu0 0
        %1453 = vmatpush1.bf16.msra.mxu0 0
        %1454 = vmatprep.subr.bf16.mxu0 0
        %1455 = vmatpush1.bf16.msra.mxu0 0
        %1456 = vmatprep.subr.bf16.mxu0 0
        %1457 = vmatpush1.bf16.msra.mxu0 0
        %1458 = vmatprep.subr.bf16.mxu0 0
        %1459 = vmatpush1.bf16.msra.mxu0 0
        %1460 = vmatprep.subr.bf16.mxu0 0
        %1461 = vmatpush1.bf16.msra.mxu0 0
        %1462 = vmatprep.subr.bf16.mxu0 0
        %1463 = vmatpush1.bf16.msra.mxu0 0
        %1464 = vmatprep.subr.bf16.mxu0 0
        %1465 = vmatpush1.bf16.msra.mxu0 0
        %1466 = vmatprep.mubr.bf16.mxu0 0
        %1467 = vmatmul.mubr.bf16.gmra.mrb[0].mxu0 %v1432
        %v1468 = vpop.f32.mrb[0].mxu0
        %v1469 = vadd.f32 %v1405, %v1468
        %v1470 = vpop.f32.mrb[0].mxu0
        %v1471 = vpop.f32.mrb[0].mxu0
        %v1472 = vpop.f32.mrb[0].mxu0
        %1473 = vdwg.mxu0
        %v1474 = vadd.f32 %v1319, %v1469
        %v1475 = vsel %vm687, %v1474, 0.0
        %1476 = vadd.xlane.f32.xlu0 %v1475
        %v1477 = vpop.xlane.xlu0 %1476
        %v1478 = vmul.f32 %v1477, %v1299
        %v1479 = vsub.f32 %v1474, %v1478
        %v1480 = vmul.f32 %v1479, %v1479
        %v1481 = vsel %vm687, %v1480, 0.0
        %1482 = vadd.xlane.f32.xlu0 %v1481
        %v1483 = vpop.xlane.xlu0 %1482
        %v1484 = vmul.f32 %v1483, %v1299
        %v1485 = vadd.f32 %v1484, 1e-12
        %v1486 = vrsqrt.pop %v1485
        %v1487 = vmul.f32 %v1479, %v1486
        %v1488 = vlaneseq
        %v1489 = vshrl.u32 %v1488, 7
        %v1490 = vsub.s32 6, %v1489
        %v1491 = vrot.slane %v665, %v1490
        %v1492 = vmul.f32 %v1487, %v1491
        %v1493 = vlaneseq
        %v1494 = vshrl.u32 %v1493, 7
        %v1495 = vsub.s32 7, %v1494
        %v1496 = vrot.slane %v665, %v1495
        %v1497 = vadd.f32 %v1492, %v1496
        %1498 = vst.msk [vmem:[#allocation2] sm:$0xff] %vm687, %v1497
        %p1499 = scmp.eq.s32.totalorder %s43, 1
        // Predicated region
        $region105: #{bert_classification_forward.1} parent=59 // pred_check
          %p1500 = pneg %p1499
        $region106: #{bert_classification_forward.1} parent=59 // pred_check_branch
          %1502 = sbr.rel (%p1500) target = $region108
        $region107: #{bert_classification_forward.1} parent=59 // pred_region
          %v1503 = vld [vmem:[#allocation2] sm:$0x1]
          %v1504 = vld [vmem:[#allocation19] sm:$0xff]
          %v1505 = vmul.f32 %v1503, %v1504
          %v1507 = vrot.slane %v1504, 1
          %v1509 = vadd.f32 %v1505, %v1507
          %v1510 = vmax.f32 %v1509, 0.0
          %v1511 = vpack.c.bf16 %v1510, %v1510
          %v1512 = vld [vmem:[#allocation16] sm:$0xf]
          %v1513 = vld [vmem:[#allocation16 + $0x4] sm:$0xf]
          %v1514 = vld [vmem:[#allocation16 + $0x8] sm:$0xf]
          %v1515 = vld [vmem:[#allocation16 + $0xc] sm:$0xf]
          %v1520 = vunpack.c.l.b16 %v1512
          %v1521 = vunpack.c.l.b16 %v1513
          %v1522 = vunpack.c.l.b16 %v1514
          %v1523 = vunpack.c.l.b16 %v1515
          %v1524 = vpack.c.b16 %v1521, %v1520
          %v1525 = vpack.c.b16 %v1523, %v1522
          %v1528 = vrot.slane %v1504, 2
          %v1531 = vsel %vm687, %v1511, 0
          %1533 = vmatprep.subr.bf16.mxu0 0
          %1534 = vmatpush1.bf16.msra.mxu0 %v1524
          %1535 = vmatprep.subr.bf16.mxu0 0
          %1536 = vmatpush1.bf16.msra.mxu0 %v1525
          %1537 = vmatprep.subr.bf16.mxu0 0
          %1538 = vmatpush1.bf16.msra.mxu0 0
          %1539 = vmatprep.subr.bf16.mxu0 0
          %1540 = vmatpush1.bf16.msra.mxu0 0
          %1541 = vmatprep.subr.bf16.mxu0 0
          %1542 = vmatpush1.bf16.msra.mxu0 0
          %1543 = vmatprep.subr.bf16.mxu0 0
          %1544 = vmatpush1.bf16.msra.mxu0 0
          %1545 = vmatprep.subr.bf16.mxu0 0
          %1546 = vmatpush1.bf16.msra.mxu0 0
          %1547 = vmatprep.subr.bf16.mxu0 0
          %1548 = vmatpush1.bf16.msra.mxu0 0
          %1549 = vmatprep.subr.bf16.mxu0 0
          %1550 = vmatpush1.bf16.msra.mxu0 0
          %1551 = vmatprep.subr.bf16.mxu0 0
          %1552 = vmatpush1.bf16.msra.mxu0 0
          %1553 = vmatprep.subr.bf16.mxu0 0
          %1554 = vmatpush1.bf16.msra.mxu0 0
          %1555 = vmatprep.subr.bf16.mxu0 0
          %1556 = vmatpush1.bf16.msra.mxu0 0
          %1557 = vmatprep.subr.bf16.mxu0 0
          %1558 = vmatpush1.bf16.msra.mxu0 0
          %1559 = vmatprep.subr.bf16.mxu0 0
          %1560 = vmatpush1.bf16.msra.mxu0 0
          %1561 = vmatprep.subr.bf16.mxu0 0
          %1562 = vmatpush1.bf16.msra.mxu0 0
          %1563 = vmatprep.subr.bf16.mxu0 0
          %1564 = vmatpush1.bf16.msra.mxu0 0
          %1565 = vmatprep.mubr.bf16.mxu0 0
          %1566 = vmatmul.mubr.bf16.gmra.mrb[0].mxu0 %v1531
          %v1567 = vpop.f32.mrb[0].mxu0
          %v1568 = vadd.f32 %v1528, %v1567
          %v1569 = vpop.f32.mrb[0].mxu0
          %v1570 = vpop.f32.mrb[0].mxu0
          %v1571 = vpop.f32.mrb[0].mxu0
          %1572 = vdwg.mxu0
          %v1573 = vmax.f32 %v1568, 0.0
          %v1574 = vpack.c.bf16 %v1573, %v1573
          %v1575 = vld [vmem:[#allocation18] sm:$0xf]
          %v1576 = vld [vmem:[#allocation18 + $0x4] sm:$0xf]
          %v1577 = vld [vmem:[#allocation18 + $0x8] sm:$0xf]
          %v1578 = vld [vmem:[#allocation18 + $0xc] sm:$0xf]
          %v1579 = vld [vmem:[#allocation18 + $0x10] sm:$0xf]
          %v1580 = vld [vmem:[#allocation18 + $0x14] sm:$0xf]
          %v1581 = vld [vmem:[#allocation18 + $0x18] sm:$0xf]
          %v1582 = vld [vmem:[#allocation18 + $0x1c] sm:$0xf]
          %v1591 = vunpack.c.l.b16 %v1575
          %v1592 = vunpack.c.l.b16 %v1576
          %v1593 = vunpack.c.l.b16 %v1577
          %v1594 = vunpack.c.l.b16 %v1578
          %v1595 = vunpack.c.l.b16 %v1579
          %v1596 = vunpack.c.l.b16 %v1580
          %v1597 = vunpack.c.l.b16 %v1581
          %v1598 = vunpack.c.l.b16 %v1582
          %v1599 = vpack.c.b16 %v1592, %v1591
          %v1600 = vpack.c.b16 %v1594, %v1593
          %v1601 = vpack.c.b16 %v1596, %v1595
          %v1602 = vpack.c.b16 %v1598, %v1597
          %v1607 = vrot.slane %v1504, 3
          %v1610 = vsel %vm1430, %v1574, 0
          %1612 = vmatprep.subr.bf16.mxu0 0
          %1613 = vmatpush1.bf16.msra.mxu0 %v1599
          %1614 = vmatprep.subr.bf16.mxu0 0
          %1615 = vmatpush1.bf16.msra.mxu0 %v1600
          %1616 = vmatprep.subr.bf16.mxu0 0
          %1617 = vmatpush1.bf16.msra.mxu0 %v1601
          %1618 = vmatprep.subr.bf16.mxu0 0
          %1619 = vmatpush1.bf16.msra.mxu0 %v1602
          %1620 = vmatprep.subr.bf16.mxu0 0
          %1621 = vmatpush1.bf16.msra.mxu0 0
          %1622 = vmatprep.subr.bf16.mxu0 0
          %1623 = vmatpush1.bf16.msra.mxu0 0
          %1624 = vmatprep.subr.bf16.mxu0 0
          %1625 = vmatpush1.bf16.msra.mxu0 0
          %1626 = vmatprep.subr.bf16.mxu0 0
          %1627 = vmatpush1.bf16.msra.mxu0 0
          %1628 = vmatprep.subr.bf16.mxu0 0
          %1629 = vmatpush1.bf16.msra.mxu0 0
          %1630 = vmatprep.subr.bf16.mxu0 0
          %1631 = vmatpush1.bf16.msra.mxu0 0
          %1632 = vmatprep.subr.bf16.mxu0 0
          %1633 = vmatpush1.bf16.msra.mxu0 0
          %1634 = vmatprep.subr.bf16.mxu0 0
          %1635 = vmatpush1.bf16.msra.mxu0 0
          %1636 = vmatprep.subr.bf16.mxu0 0
          %1637 = vmatpush1.bf16.msra.mxu0 0
          %1638 = vmatprep.subr.bf16.mxu0 0
          %1639 = vmatpush1.bf16.msra.mxu0 0
          %1640 = vmatprep.subr.bf16.mxu0 0
          %1641 = vmatpush1.bf16.msra.mxu0 0
          %1642 = vmatprep.subr.bf16.mxu0 0
          %1643 = vmatpush1.bf16.msra.mxu0 0
          %1644 = vmatprep.mubr.bf16.mxu0 0
          %1645 = vmatmul.mubr.bf16.gmra.mrb[0].mxu0 %v1610
          %v1646 = vpop.f32.mrb[0].mxu0
          %v1647 = vadd.f32 %v1607, %v1646
          %v1648 = vpop.f32.mrb[0].mxu0
          %v1649 = vpop.f32.mrb[0].mxu0
          %v1650 = vpop.f32.mrb[0].mxu0
          %1651 = vdwg.mxu0
          %v1652 = vmax.f32 %v1647, 0.0
          %v1653 = vlaneseq
          %v1654 = vshrl.u32 %v1653, 7
          %v1655 = vsub.s32 0, %v1654
          %v1656 = vrot.slane %v1652, %v1655
          %1657 = vst [vmem:[%s655] sm:$0xff] %v1656
        $region108: #{bert_classification_forward.1} parent=59 // pred_fallthru
          _
        %s1658 = sand.u32 %s303, 1
        %s1659 = scalar_lea.sflag [#allocation6], %s1658
        %s1660 = sand.u32 %s303, 1
        %s1661 = smul.addr %s1660, 8
        %s1662 = scalar_lea.vmem [#allocation21], %s1661
        // Predicated region
        $region109: #{bert_classification_forward.1} parent=59 // pred_check
          %p1663 = pneg %p313
        $region110: #{bert_classification_forward.1} parent=59 // pred_check_branch
          %1665 = sbr.rel (%p1663) target = $region112
        $region111: #{bert_classification_forward.1} parent=59 // pred_region
          %s1667 = ssub.s32 128, 128
          %1668 = vsyncadd %s1659, %s1667
          %s1669 = smul.addr %s42, 128
          %s1670 = scalar_lea.hbm %s10, %s1669
          %s1672 = sshll.u32 %s1662, 4
          %s1673 = int_to_ptr.vmem [resolvable:$true] %s1672
          %1675 = dma.vmem_to_hbm [thread:$0]  %s1673, 128, %s1670, %s1659
        $region112: #{bert_classification_forward.1} parent=59 // pred_fallthru
          _
      $region60: #{bert_classification_forward.1} parent=5 // pred_fallthru
        _
      %p1676 = scmp.le.s32.totalorder 2, %s33
      // Predicated region
      $region113: #{bert_classification_forward.1} parent=5 // pred_check
        %p1677 = pneg %p1676
      $region114: #{bert_classification_forward.1} parent=5 // pred_check_branch
        %1679 = sbr.rel (%p1677) target = $region116
      $region115: #{bert_classification_forward.1} parent=5 // pred_region
        %s1680 = ssub.s32 %s33, 2
        // Predicated region
        $region117: #{bert_classification_forward.1} parent=115 // pred_check
          %p1681 = pneg %p319
        $region118: #{bert_classification_forward.1} parent=115 // pred_check_branch
          %1683 = sbr.rel (%p1681) target = $region120
        $region119: #{bert_classification_forward.1} parent=115 // pred_region
          %s1684 = sand.u32 %s304, 1
          %s1685 = scalar_lea.sflag [#allocation6], %s1684
          %s1686 = sand.u32 %s304, 1
          %s1687 = smul.addr %s1686, 8
          %s1688 = scalar_lea.vmem [#allocation21], %s1687
          %1689 = dma.done %s1685, 128
        $region120: #{bert_classification_forward.1} parent=115 // pred_fallthru
          _
      $region116: #{bert_classification_forward.1} parent=5 // pred_fallthru
        _
    $region6: #{bert_classification_forward.1} parent=1 // loop_footer
      %s37 = sadd.s32 1, %s33
    $region7: #{bert_classification_forward.1} parent=1 // loop_footer_branch
      %32 = sbr.rel target = $region3
    $region8: #{bert_classification_forward.1} parent=1 // loop_exit
      _
    %1690 = vsyncpa [#allocation5], 1
    %s1691 = scalar_lea.sflag [#allocation5], 1
    %1692 = vsyncpa %s1691, 1
    %1693 = vsyncpa [#allocation8], 1
    %s1694 = scalar_lea.sflag [#allocation8], 1
    %1695 = vsyncpa %s1694, 1
    %1696 = vsyncpa [#allocation11], 1
    %s1697 = scalar_lea.sflag [#allocation11], 1
    %1698 = vsyncpa %s1697, 1
    %1699 = vsyncpa [#allocation14], 1
    %s1700 = scalar_lea.sflag [#allocation14], 1
    %1701 = vsyncpa %s1700, 1
    %1702 = vsyncpa [#allocation17], 1
    %1703 = vsyncpa [#allocation20], 1
    %1704 = vsyncpa [#allocation6], 1
    %s1705 = scalar_lea.sflag [#allocation6], 1
    %1706 = vsyncpa %s1705, 1

</llo_original>
